<compile_context>
chip_gen: v6e
topology: v6e:2x2x1
jax: 0.10.0
libtpu: 0.0.40
codegen_flags: <defaults>
</compile_context>

<pallas_src>
import jax
import jax.numpy as jnp
from jax.experimental import pallas as pl
from jax.experimental.pallas import tpu as pltpu

# ---- model hyper-params (synthetic, consistent with the module) -------------
N_MODELS = 4        # len(model_list)   (real config: 50; kept small here)
FEATURES = 32       # in_features of each base model's final fc (now Identity)
HIDDEN   = 64       # penultimate hidden width of each base model's fc_block
OUTSHAPE = 3        # regressor output size
DROP_P   = 0.0      # initial_config['drop_p_ensemble'] == 0.0 -> identity

B_TILE   = 128      # batch rows per grid step (multiple of 8; matches v5e MXU M)
OUT_PAD  = 128      # lane-dense padded output width (real output = first 3 cols)


def ensemble_kernel(x_ref,              # (TB, Din)      bf16
                    w1_ref, b1_ref,     # (Din, N*H) bf16, (1, N*H) f32
                    w2_ref, b2_ref,     # (N*H, N*F) bf16, (1, N*F) f32
                    wgr_ref, bgr_ref,   # (N*F, 128) bf16, (1, 128) f32
                    out_ref):           # (TB, 128)      f32
    # all base models' first layers in one MXU pass (bf16 operands, f32 acc)
    h = jnp.dot(x_ref[...], w1_ref[...], preferred_element_type=jnp.float32)
    h = jnp.maximum(h + b1_ref[...], 0.0)                       # f32 VPU path

    # all second layers via block-diagonal weights -> already the concatenated
    # feature tensor, lane-dense (no XLU concat shuffles)
    tmp = jnp.dot(h.astype(jnp.bfloat16), w2_ref[...],
                  preferred_element_type=jnp.float32)
    tmp = jnp.maximum(tmp + b2_ref[...], 0.0)                   # relu(concat(feats))

    # gate -> dropout(p=0, identity) -> regressor, folded into one matmul;
    # output columns >= OUTSHAPE are zero padding (lane-dense store).
    o = jnp.dot(tmp.astype(jnp.bfloat16), wgr_ref[...],
                preferred_element_type=jnp.float32)
    out_ref[...] = o + bgr_ref[...]


def prepare_fused_params(params):
    """Wrapper-side layout work: fuse/fold per-model params (exact in f32, then
    matmul operands are stored bf16 for MXU rate / halved DMA)."""
    w1, b1 = params["w1"], params["b1"]            # (N, Din, H), (N, 1, H)
    w2, b2 = params["w2"], params["b2"]            # (N, H, F),   (N, 1, F)
    din = w1.shape[1]

    # layer 1: (N, Din, H) -> (Din, N*H), model-major column order
    w1_all = jnp.transpose(w1, (1, 0, 2)).reshape(din, N_MODELS * HIDDEN)
    b1_all = jnp.transpose(b1, (1, 0, 2)).reshape(1, N_MODELS * HIDDEN)

    # layer 2: block-diagonal (N*H, N*F); block i maps model i's hidden->features.
    # Column order is model-major, matching the PyTorch torch.cat((...), dim=1).
    w2_bd = jnp.zeros((N_MODELS * HIDDEN, N_MODELS * FEATURES), jnp.float32)
    for i in range(N_MODELS):
        w2_bd = w2_bd.at[i * HIDDEN:(i + 1) * HIDDEN,
                         i * FEATURES:(i + 1) * FEATURES].set(w2[i])
    b2_all = jnp.transpose(b2, (1, 0, 2)).reshape(1, N_MODELS * FEATURES)

    # gate + regressor fold (exact: dropout p=0.0, no activation in between),
    # then zero-pad the output dim to OUT_PAD lanes for an unmasked store.
    wgr = params["gate_w"] @ params["reg_w"]                      # (N*F, OUT)
    bgr = params["gate_b"] @ params["reg_w"] + params["reg_b"]    # (1, OUT)
    wgr_pad = jnp.zeros((N_MODELS * FEATURES, OUT_PAD), jnp.float32)
    wgr_pad = wgr_pad.at[:, :OUTSHAPE].set(wgr)
    bgr_pad = jnp.zeros((1, OUT_PAD), jnp.float32).at[:, :OUTSHAPE].set(bgr)

    return {
        "w1_all": w1_all.astype(jnp.bfloat16), "b1_all": b1_all,        # bias f32
        "w2_bd":  w2_bd.astype(jnp.bfloat16),  "b2_all": b2_all,        # bias f32
        "wgr":    wgr_pad.astype(jnp.bfloat16), "bgr":   bgr_pad,       # bias f32
    }


def my_ensemble_forward(x_nchw, fused):
    """x_nchw: (B, C, H, W) float32.  Returns (B, OUTSHAPE) float32."""
    B = x_nchw.shape[0]
    x_flat = x_nchw.reshape(B, -1)                    # glue: flatten NCHW
    din = x_flat.shape[1]
    nh = N_MODELS * HIDDEN
    nf = N_MODELS * FEATURES

    # Pad batch to a multiple of B_TILE (padded rows are sliced off afterwards).
    n_tiles = pl.cdiv(B, B_TILE)
    b_pad = n_tiles * B_TILE
    if b_pad != B:
        x_flat = jnp.pad(x_flat, ((0, b_pad - B), (0, 0)))
    x_bf16 = x_flat.astype(jnp.bfloat16)              # halve the streamed x DMA

    # Constant block index -> weights stay VMEM-resident across batch tiles;
    # only x / out are streamed per grid step.
    const = lambda shape: pl.BlockSpec(shape, lambda b: (0, 0))

    out = pl.pallas_call(
        ensemble_kernel,
        out_shape=jax.ShapeDtypeStruct((b_pad, OUT_PAD), jnp.float32),
        grid=(n_tiles,),
        in_specs=[
            pl.BlockSpec((B_TILE, din), lambda b: (b, 0)),     # x (streamed)
            const((din, nh)), const((1, nh)),                  # fused layer 1
            const((nh, nf)), const((1, nf)),                   # block-diag layer 2
            const((nf, OUT_PAD)), const((1, OUT_PAD)),         # gate@regressor
        ],
        out_specs=pl.BlockSpec((B_TILE, OUT_PAD), lambda b: (b, 0)),
        compiler_params=pltpu.CompilerParams(
            # batch tiles are independent -> shard across TensorCores on v7x
            dimension_semantics=("parallel",),
            vmem_limit_bytes=48 * 1024 * 1024,
        ),
    )(x_bf16,
      fused["w1_all"], fused["b1_all"],
      fused["w2_bd"], fused["b2_all"],
      fused["wgr"], fused["bgr"])

    # Drop batch padding and the lane padding of the 3-wide output.
    return out[:B, :OUTSHAPE]


def init_params(key, din):
    """Deterministic synthetic parameters, stored (in, out) so x @ W + b matches
    PyTorch's x @ W.T + b with W of shape (out, in)."""
    ks = jax.random.split(key, 6)
    scale = 0.02
    return {
        "w1":     scale * jax.random.normal(ks[0], (N_MODELS, din, HIDDEN), jnp.float32),
        "b1":     jnp.zeros((N_MODELS, 1, HIDDEN), jnp.float32),
        "w2":     scale * jax.random.normal(ks[1], (N_MODELS, HIDDEN, FEATURES), jnp.float32),
        "b2":     scale * jax.random.normal(ks[2], (N_MODELS, 1, FEATURES), jnp.float32),
        "gate_w": scale * jax.random.normal(ks[3], (N_MODELS * FEATURES, FEATURES), jnp.float32),
        "gate_b": jnp.zeros((1, FEATURES), jnp.float32),
        "reg_w":  scale * jax.random.normal(ks[4], (FEATURES, OUTSHAPE), jnp.float32),
        "reg_b":  scale * jax.random.normal(ks[5], (1, OUTSHAPE), jnp.float32),
    }


def reference_forward(x_nchw, params):
    """Pure-JAX UNFUSED f32 reference (per-model loop + concat + gate + regressor),
    mirroring the PyTorch forward."""
    B = x_nchw.shape[0]
    x = x_nchw.reshape(B, -1)
    feats = []
    for i in range(N_MODELS):
        h = jnp.maximum(x @ params["w1"][i] + params["b1"][i], 0.0)
        feats.append(h @ params["w2"][i] + params["b2"][i])
    tmp = jnp.maximum(jnp.concatenate(feats, axis=1), 0.0)
    g = tmp @ params["gate_w"] + params["gate_b"]
    # dropout p=0.0 == identity
    return g @ params["reg_w"] + params["reg_b"]


if __name__ == "__main__":
    key = jax.random.PRNGKey(0)
    kx, kp = jax.random.split(key)

    # Small NCHW input; batch deliberately not a multiple of B_TILE to exercise
    # the wrapper-side padding, and large enough for 2 grid steps (v7x 2-TC path).
    B, C, H, W = 200, 4, 16, 16
    x = jax.random.normal(kx, (B, C, H, W), jnp.float32)
    params = init_params(kp, C * H * W)
    fused = prepare_fused_params(params)

    out = my_ensemble_forward(x, fused)
    out = jax.block_until_ready(out)

    ref = reference_forward(x, params)
    assert out.shape == (B, OUTSHAPE)
    # bf16 matmul operands (f32 accumulation) -> tolerance relaxed vs the pure-f32
    # variant; a layout/ordering bug would produce errors orders of magnitude larger.
    assert jnp.allclose(out, ref, atol=5e-3, rtol=5e-2), (
        float(jnp.max(jnp.abs(out - ref))))

    print("KERNEL_OK")
</pallas_src>

<mosaic_0001>
module attributes {stable_mosaic.version = 11 : i64} {
  func.func @ensemble_kernel(%arg0: i32, %arg1: memref<128x1024xbf16, #tpu.memory_space<vmem>>, %arg2: memref<1024x256xbf16, #tpu.memory_space<vmem>>, %arg3: memref<1x256xf32, #tpu.memory_space<vmem>>, %arg4: memref<256x128xbf16, #tpu.memory_space<vmem>>, %arg5: memref<1x128xf32, #tpu.memory_space<vmem>>, %arg6: memref<128x128xbf16, #tpu.memory_space<vmem>>, %arg7: memref<1x128xf32, #tpu.memory_space<vmem>>, %arg8: memref<128x128xf32, #tpu.memory_space<vmem>>) attributes {dimension_semantics = [#tpu.dimension_semantics<parallel>], iteration_bounds = array<i64: 2>, scalar_prefetch = 0 : i64, scratch_operands = 0 : i64, tpu.core_type = #tpu.core_type<tc>, window_params = [{transform_indices = @transform_0, window_bounds = array<i64: 128, 1024>}, {pipeline_mode = #tpu.pipeline_mode<synchronous>, transform_indices = @transform_1, window_bounds = array<i64: 1024, 256>}, {pipeline_mode = #tpu.pipeline_mode<synchronous>, transform_indices = @transform_2, window_bounds = array<i64: 1, 256>}, {pipeline_mode = #tpu.pipeline_mode<synchronous>, transform_indices = @transform_3, window_bounds = array<i64: 256, 128>}, {pipeline_mode = #tpu.pipeline_mode<synchronous>, transform_indices = @transform_4, window_bounds = array<i64: 1, 128>}, {pipeline_mode = #tpu.pipeline_mode<synchronous>, transform_indices = @transform_5, window_bounds = array<i64: 128, 128>}, {pipeline_mode = #tpu.pipeline_mode<synchronous>, transform_indices = @transform_6, window_bounds = array<i64: 1, 128>}, {transform_indices = @transform_7, window_bounds = array<i64: 128, 128>}]} {
    %c0 = arith.constant 0 : index
    %c0_0 = arith.constant 0 : index
    %0 = vector.load %arg1[%c0, %c0_0] : memref<128x1024xbf16, #tpu.memory_space<vmem>>, vector<128x1024xbf16>
    %c0_1 = arith.constant 0 : index
    %c0_2 = arith.constant 0 : index
    %1 = vector.load %arg2[%c0_1, %c0_2] : memref<1024x256xbf16, #tpu.memory_space<vmem>>, vector<1024x256xbf16>
    %cst = arith.constant dense<0.000000e+00> : vector<128x256xf32>
    %2 = tpu.matmul %0, %1, %cst {dimension_numbers = #tpu.dot_dimension_numbers<[1], [0], [0], [1], [0, 0, 1, 1], [], []>} : vector<128x1024xbf16>, vector<1024x256xbf16>, vector<128x256xf32> -> vector<128x256xf32>
    %c0_3 = arith.constant 0 : index
    %c0_4 = arith.constant 0 : index
    %3 = vector.load %arg3[%c0_3, %c0_4] : memref<1x256xf32, #tpu.memory_space<vmem>>, vector<1x256xf32>
    %4 = vector.broadcast %3 : vector<1x256xf32> to vector<128x256xf32>
    %5 = arith.addf %2, %4 : vector<128x256xf32>
    %cst_5 = arith.constant 0.000000e+00 : f32
    %6 = vector.broadcast %cst_5 : f32 to vector<128x256xf32>
    %7 = arith.maximumf %5, %6 : vector<128x256xf32>
    %8 = arith.truncf %7 : vector<128x256xf32> to vector<128x256xbf16>
    %c0_6 = arith.constant 0 : index
    %c0_7 = arith.constant 0 : index
    %9 = vector.load %arg4[%c0_6, %c0_7] : memref<256x128xbf16, #tpu.memory_space<vmem>>, vector<256x128xbf16>
    %cst_8 = arith.constant dense<0.000000e+00> : vector<128x128xf32>
    %10 = tpu.matmul %8, %9, %cst_8 {dimension_numbers = #tpu.dot_dimension_numbers<[1], [0], [0], [1], [0, 0, 1, 1], [], []>} : vector<128x256xbf16>, vector<256x128xbf16>, vector<128x128xf32> -> vector<128x128xf32>
    %c0_9 = arith.constant 0 : index
    %c0_10 = arith.constant 0 : index
    %11 = vector.load %arg5[%c0_9, %c0_10] : memref<1x128xf32, #tpu.memory_space<vmem>>, vector<1x128xf32>
    %12 = vector.broadcast %11 : vector<1x128xf32> to vector<128x128xf32>
    %13 = arith.addf %10, %12 : vector<128x128xf32>
    %cst_11 = arith.constant 0.000000e+00 : f32
    %14 = vector.broadcast %cst_11 : f32 to vector<128x128xf32>
    %15 = arith.maximumf %13, %14 : vector<128x128xf32>
    %16 = arith.truncf %15 : vector<128x128xf32> to vector<128x128xbf16>
    %c0_12 = arith.constant 0 : index
    %c0_13 = arith.constant 0 : index
    %17 = vector.load %arg6[%c0_12, %c0_13] : memref<128x128xbf16, #tpu.memory_space<vmem>>, vector<128x128xbf16>
    %cst_14 = arith.constant dense<0.000000e+00> : vector<128x128xf32>
    %18 = tpu.matmul %16, %17, %cst_14 {dimension_numbers = #tpu.dot_dimension_numbers<[1], [0], [0], [1], [0, 0, 1, 1], [], []>} : vector<128x128xbf16>, vector<128x128xbf16>, vector<128x128xf32> -> vector<128x128xf32>
    %c0_15 = arith.constant 0 : index
    %c0_16 = arith.constant 0 : index
    %19 = vector.load %arg7[%c0_15, %c0_16] : memref<1x128xf32, #tpu.memory_space<vmem>>, vector<1x128xf32>
    %20 = vector.broadcast %19 : vector<1x128xf32> to vector<128x128xf32>
    %21 = arith.addf %18, %20 : vector<128x128xf32>
    %c0_17 = arith.constant 0 : index
    %c0_18 = arith.constant 0 : index
    %22 = vector.load %arg8[%c0_17, %c0_18] : memref<128x128xf32, #tpu.memory_space<vmem>>, vector<128x128xf32>
    tpu.vector_store %arg8[%c0_17, %c0_18], %21 {strides = array<i32>} : memref<128x128xf32, #tpu.memory_space<vmem>>, vector<128x128xf32>,
    return
  }
  func.func @transform_0(%arg0: i32) -> (i32, i32) {
    %c0_i32 = arith.constant 0 : i32
    %c0_i32_0 = arith.constant 0 : i32
    return %arg0, %c0_i32 : i32, i32
  }
  func.func @transform_1(%arg0: i32) -> (i32, i32) {
    %c0_i32 = arith.constant 0 : i32
    %c0_i32_0 = arith.constant 0 : i32
    %c0_i32_1 = arith.constant 0 : i32
    return %c0_i32, %c0_i32_0 : i32, i32
  }
  func.func @transform_2(%arg0: i32) -> (i32, i32) {
    %c0_i32 = arith.constant 0 : i32
    %c0_i32_0 = arith.constant 0 : i32
    %c0_i32_1 = arith.constant 0 : i32
    return %c0_i32, %c0_i32_0 : i32, i32
  }
  func.func @transform_3(%arg0: i32) -> (i32, i32) {
    %c0_i32 = arith.constant 0 : i32
    %c0_i32_0 = arith.constant 0 : i32
    %c0_i32_1 = arith.constant 0 : i32
    return %c0_i32, %c0_i32_0 : i32, i32
  }
  func.func @transform_4(%arg0: i32) -> (i32, i32) {
    %c0_i32 = arith.constant 0 : i32
    %c0_i32_0 = arith.constant 0 : i32
    %c0_i32_1 = arith.constant 0 : i32
    return %c0_i32, %c0_i32_0 : i32, i32
  }
  func.func @transform_5(%arg0: i32) -> (i32, i32) {
    %c0_i32 = arith.constant 0 : i32
    %c0_i32_0 = arith.constant 0 : i32
    %c0_i32_1 = arith.constant 0 : i32
    return %c0_i32, %c0_i32_0 : i32, i32
  }
  func.func @transform_6(%arg0: i32) -> (i32, i32) {
    %c0_i32 = arith.constant 0 : i32
    %c0_i32_0 = arith.constant 0 : i32
    %c0_i32_1 = arith.constant 0 : i32
    return %c0_i32, %c0_i32_0 : i32, i32
  }
  func.func @transform_7(%arg0: i32) -> (i32, i32) {
    %c0_i32 = arith.constant 0 : i32
    %c0_i32_0 = arith.constant 0 : i32
    return %arg0, %c0_i32 : i32, i32
  }
}

</mosaic_0001>

<llo_original>
// kernel: tpu_custom_call.1
$region0: #{tpu_custom_call.1}
  #allocation0 [shape = 'u32[]', space=smem, size = 0x4, offset = 0x4, fixed_abs, tag = 'smem constant byte address 0x4 - core index']
  #allocation1 [shape = 'u32[144,128]{1,0:T(1,128)}', space=vmem, size = 0x12000, scoped, tag = 'internal scratch']
  %s0 = inlined_call_operand.hbm [shape: bf16[256,1024], index: 0, kind: input, shape index: {}]
  %s1 = inlined_call_operand.hbm [shape: bf16[1024,256], index: 1, kind: input, shape index: {}]
  %s2 = inlined_call_operand.vmem [shape: f32[1,256], index: 2, kind: input, shape index: {}]
  %s3 = inlined_call_operand.hbm [shape: bf16[256,128], index: 3, kind: input, shape index: {}]
  %s4 = inlined_call_operand.vmem [shape: f32[1,128], index: 4, kind: input, shape index: {}]
  %s5 = inlined_call_operand.hbm [shape: bf16[128,128], index: 5, kind: input, shape index: {}]
  %s6 = inlined_call_operand.vmem [shape: f32[1,128], index: 6, kind: input, shape index: {}]
  %s7 = inlined_call_operand.hbm [shape: f32[256,128], index: 7, kind: output, shape index: {}]
  %s8 = sld [smem:[#allocation0]]
  $region77: #{tpu_custom_call.1} parent=0
    _
  %s10 = ssub.s32 1, %s8
  %s11 = scalar_select 0, %s10, %s8
  $region1: #{tpu_custom_call.1} parent=0
    #allocation2 [shape = 'u8[524288]{0}', space=vmem, size = 0x80000, scoped, tag = 'input window, operand 0']
    #allocation3 [shape = 's32[2]{0}', space=sflag, size = 0x8, scoped, tag = 'scoped memory for tpu_custom_call.1']
    #allocation4 [shape = 's32[2]{0}', space=sflag, size = 0x8, scoped, tag = 'scoped memory for tpu_custom_call.1']
    #allocation5 [shape = 'u8[524288]{0}', space=vmem, size = 0x80000, scoped, tag = 'input window, operand 1, single buffered']
    #allocation6 [shape = 's32[1]{0}', space=sflag, size = 0x4, scoped, tag = 'scoped memory for tpu_custom_call.1']
    #allocation7 [shape = 'u8[65536]{0}', space=vmem, size = 0x10000, scoped, tag = 'input window, operand 3, single buffered']
    #allocation8 [shape = 'u8[32768]{0}', space=vmem, size = 0x8000, scoped, tag = 'input window, operand 5, single buffered']
    #allocation9 [shape = 's32[1]{0}', space=sflag, size = 0x4, scoped, tag = 'scoped memory for tpu_custom_call.1']
    #allocation10 [shape = 'u8[131072]{0}', space=vmem, size = 0x20000, scoped, tag = 'output window, operand 0']
    %12 = vsyncpa [#allocation3], 0
    %s13 = scalar_lea.sflag [#allocation3], 1
    %14 = vsyncpa %s13, 0
    %15 = vsyncpa [#allocation6], 0
    %16 = vsyncpa [#allocation9], 0
    %17 = vsyncpa [#allocation4], 0
    %s18 = scalar_lea.sflag [#allocation4], 1
    %19 = vsyncpa %s18, 0
    loop: start=0, step=1, limit=4
    $region2: #{tpu_custom_call.1} parent=1 // loop_pre_header
      _
    $region3: #{tpu_custom_call.1} parent=1 // loop_header
      %s21 = sphi 0, %s25
      %p22 = scmp.ge.s32.totalorder %s21, 4
      %s31 = sphi 0, %s33
      %s34 = sphi 0, %s31
      %s35 = sphi 0, %s34
      %s51 = sphi 0, %s35
      %s55 = sphi 0, %s55
      %s57 = sphi 0, %s55
      %s58 = sphi 0, %s57
      %s72 = sphi 0, %s58
      %s76 = sphi 0, %s76
      %s78 = sphi 0, %s76
      %s79 = sphi 0, %s78
      %s93 = sphi 0, %s79
      %s97 = sphi 0, %s97
      %s99 = sphi 0, %s97
      %s100 = sphi 0, %s99
      %s114 = sphi 0, %s100
      %s118 = sphi 0, %s118
      %s120 = sphi 0, %s118
      %s121 = sphi 0, %s120
      %s135 = sphi 0, %s121
      %s139 = sphi 0, %s139
      %s141 = sphi 0, %s139
      %s142 = sphi 0, %s141
      %s156 = sphi 0, %s142
      %s160 = sphi 0, %s160
      %s162 = sphi 0, %s160
      %s163 = sphi 0, %s162
      %s177 = sphi 0, %s163
      %s183 = sphi 0, %s185
      %s186 = sphi 0, %s183
      %s187 = sphi 0, %s186
      %s203 = sphi 0, %s187
    $region4: #{tpu_custom_call.1} parent=1 // loop_header_branch
      %24 = sbr.rel (%p22) target = $region8
    $region5: #{tpu_custom_call.1} parent=1 // loop_body
      %s26 = ssub.s32 %s21, 1
      %s27 = ssub.s32 %s21, 2
      %s28 = sadd.s32 %s21, 1
      %s29 = ssub.s32 %s21, %s28
      %p30 = scmp.eq.s32.totalorder %s29, 0
      %s32 = sadd.s32 %s31, 1
      %s33 = scalar_select %p30, %s31, %s32
      %p36 = pneg %p30
      %p37 = scmp.eq.s32.totalorder %s21, 1
      %p38 = por %p36, %p37
      %p39 = scmp.ne.s32.totalorder %s31, %s34
      %p40 = scmp.eq.s32.totalorder %s21, 0
      %p41 = por %p39, %p40
      %p42 = scmp.ne.s32.totalorder %s31, %s34
      %p43 = scmp.eq.s32.totalorder %s26, 1
      %p44 = por %p42, %p43
      %p45 = scmp.ne.s32.totalorder %s34, %s35
      %p46 = scmp.eq.s32.totalorder %s26, 0
      %p47 = por %p45, %p46
      %p48 = scmp.ne.s32.totalorder %s34, %s35
      %p49 = scmp.eq.s32.totalorder %s27, 1
      %p50 = por %p48, %p49
      %p52 = scmp.ne.s32.totalorder %s35, %s51
      %p53 = scmp.eq.s32.totalorder %s27, 0
      %p54 = por %p52, %p53
      %s56 = sadd.s32 %s55, 1
      %p59 = scmp.eq.s32.totalorder %s21, 1
      %p60 = scmp.ne.s32.totalorder %s55, %s57
      %p61 = scmp.eq.s32.totalorder %s21, 0
      %p62 = por %p60, %p61
      %p63 = scmp.ne.s32.totalorder %s55, %s57
      %p64 = scmp.eq.s32.totalorder %s26, 1
      %p65 = por %p63, %p64
      %p66 = scmp.ne.s32.totalorder %s57, %s58
      %p67 = scmp.eq.s32.totalorder %s26, 0
      %p68 = por %p66, %p67
      %p69 = scmp.ne.s32.totalorder %s57, %s58
      %p70 = scmp.eq.s32.totalorder %s27, 1
      %p71 = por %p69, %p70
      %p73 = scmp.ne.s32.totalorder %s58, %s72
      %p74 = scmp.eq.s32.totalorder %s27, 0
      %p75 = por %p73, %p74
      %s77 = sadd.s32 %s76, 1
      %p80 = scmp.eq.s32.totalorder %s21, 1
      %p81 = scmp.ne.s32.totalorder %s76, %s78
      %p82 = scmp.eq.s32.totalorder %s21, 0
      %p83 = por %p81, %p82
      %p84 = scmp.ne.s32.totalorder %s76, %s78
      %p85 = scmp.eq.s32.totalorder %s26, 1
      %p86 = por %p84, %p85
      %p87 = scmp.ne.s32.totalorder %s78, %s79
      %p88 = scmp.eq.s32.totalorder %s26, 0
      %p89 = por %p87, %p88
      %p90 = scmp.ne.s32.totalorder %s78, %s79
      %p91 = scmp.eq.s32.totalorder %s27, 1
      %p92 = por %p90, %p91
      %p94 = scmp.ne.s32.totalorder %s79, %s93
      %p95 = scmp.eq.s32.totalorder %s27, 0
      %p96 = por %p94, %p95
      %s98 = sadd.s32 %s97, 1
      %p101 = scmp.eq.s32.totalorder %s21, 1
      %p102 = scmp.ne.s32.totalorder %s97, %s99
      %p103 = scmp.eq.s32.totalorder %s21, 0
      %p104 = por %p102, %p103
      %p105 = scmp.ne.s32.totalorder %s97, %s99
      %p106 = scmp.eq.s32.totalorder %s26, 1
      %p107 = por %p105, %p106
      %p108 = scmp.ne.s32.totalorder %s99, %s100
      %p109 = scmp.eq.s32.totalorder %s26, 0
      %p110 = por %p108, %p109
      %p111 = scmp.ne.s32.totalorder %s99, %s100
      %p112 = scmp.eq.s32.totalorder %s27, 1
      %p113 = por %p111, %p112
      %p115 = scmp.ne.s32.totalorder %s100, %s114
      %p116 = scmp.eq.s32.totalorder %s27, 0
      %p117 = por %p115, %p116
      %s119 = sadd.s32 %s118, 1
      %p122 = scmp.eq.s32.totalorder %s21, 1
      %p123 = scmp.ne.s32.totalorder %s118, %s120
      %p124 = scmp.eq.s32.totalorder %s21, 0
      %p125 = por %p123, %p124
      %p126 = scmp.ne.s32.totalorder %s118, %s120
      %p127 = scmp.eq.s32.totalorder %s26, 1
      %p128 = por %p126, %p127
      %p129 = scmp.ne.s32.totalorder %s120, %s121
      %p130 = scmp.eq.s32.totalorder %s26, 0
      %p131 = por %p129, %p130
      %p132 = scmp.ne.s32.totalorder %s120, %s121
      %p133 = scmp.eq.s32.totalorder %s27, 1
      %p134 = por %p132, %p133
      %p136 = scmp.ne.s32.totalorder %s121, %s135
      %p137 = scmp.eq.s32.totalorder %s27, 0
      %p138 = por %p136, %p137
      %s140 = sadd.s32 %s139, 1
      %p143 = scmp.eq.s32.totalorder %s21, 1
      %p144 = scmp.ne.s32.totalorder %s139, %s141
      %p145 = scmp.eq.s32.totalorder %s21, 0
      %p146 = por %p144, %p145
      %p147 = scmp.ne.s32.totalorder %s139, %s141
      %p148 = scmp.eq.s32.totalorder %s26, 1
      %p149 = por %p147, %p148
      %p150 = scmp.ne.s32.totalorder %s141, %s142
      %p151 = scmp.eq.s32.totalorder %s26, 0
      %p152 = por %p150, %p151
      %p153 = scmp.ne.s32.totalorder %s141, %s142
      %p154 = scmp.eq.s32.totalorder %s27, 1
      %p155 = por %p153, %p154
      %p157 = scmp.ne.s32.totalorder %s142, %s156
      %p158 = scmp.eq.s32.totalorder %s27, 0
      %p159 = por %p157, %p158
      %s161 = sadd.s32 %s160, 1
      %p164 = scmp.eq.s32.totalorder %s21, 1
      %p165 = scmp.ne.s32.totalorder %s160, %s162
      %p166 = scmp.eq.s32.totalorder %s21, 0
      %p167 = por %p165, %p166
      %p168 = scmp.ne.s32.totalorder %s160, %s162
      %p169 = scmp.eq.s32.totalorder %s26, 1
      %p170 = por %p168, %p169
      %p171 = scmp.ne.s32.totalorder %s162, %s163
      %p172 = scmp.eq.s32.totalorder %s26, 0
      %p173 = por %p171, %p172
      %p174 = scmp.ne.s32.totalorder %s162, %s163
      %p175 = scmp.eq.s32.totalorder %s27, 1
      %p176 = por %p174, %p175
      %p178 = scmp.ne.s32.totalorder %s163, %s177
      %p179 = scmp.eq.s32.totalorder %s27, 0
      %p180 = por %p178, %p179
      %s181 = ssub.s32 %s21, %s28
      %p182 = scmp.eq.s32.totalorder %s181, 0
      %s184 = sadd.s32 %s183, 1
      %s185 = scalar_select %p182, %s183, %s184
      %p188 = pneg %p182
      %p189 = scmp.eq.s32.totalorder %s21, 1
      %p190 = por %p188, %p189
      %p191 = scmp.ne.s32.totalorder %s183, %s186
      %p192 = scmp.eq.s32.totalorder %s21, 0
      %p193 = por %p191, %p192
      %p194 = scmp.ne.s32.totalorder %s183, %s186
      %p195 = scmp.eq.s32.totalorder %s26, 1
      %p196 = por %p194, %p195
      %p197 = scmp.ne.s32.totalorder %s186, %s187
      %p198 = scmp.eq.s32.totalorder %s26, 0
      %p199 = por %p197, %p198
      %p200 = scmp.ne.s32.totalorder %s186, %s187
      %p201 = scmp.eq.s32.totalorder %s27, 1
      %p202 = por %p200, %p201
      %p204 = scmp.ne.s32.totalorder %s187, %s203
      %p205 = scmp.eq.s32.totalorder %s27, 0
      %p206 = por %p204, %p205
      %p207 = scmp.le.s32.totalorder 1, %s21
      %p208 = scmp.lt.s32.totalorder %s21, 3
      %p209 = pnand %p207, %p208
      %p210 = pneg %p209
      // Predicated region
      $region9: #{tpu_custom_call.1} parent=5 // pred_check
        _
      $region10: #{tpu_custom_call.1} parent=5 // pred_check_branch
        %212 = sbr.rel (%p209) target = $region12
      $region11: #{tpu_custom_call.1} parent=5 // pred_region
        %s213 = ssub.s32 %s21, 1
        // Predicated region
        $region13: #{tpu_custom_call.1} parent=11 // pred_check
          %p214 = pneg %p68
        $region14: #{tpu_custom_call.1} parent=11 // pred_check_branch
          %216 = sbr.rel (%p214) target = $region16
        $region15: #{tpu_custom_call.1} parent=11 // pred_region
          %s218 = ssub.s32 16384, 16384
          %219 = vsyncadd [#allocation6], %s218
          %s220 = sshll.u32 [#allocation5], 4
          %s221 = int_to_ptr.vmem [resolvable:$true] %s220
          %226 = dma.hbm_to_vmem [thread:$0]  %s1, 16384, %s221, [#allocation6], 128, 128, 8
        $region16: #{tpu_custom_call.1} parent=11 // pred_fallthru
          _
        // Predicated region
        $region17: #{tpu_custom_call.1} parent=11 // pred_check
          %p227 = pneg %p89
        $region18: #{tpu_custom_call.1} parent=11 // pred_check_branch
          %229 = sbr.rel (%p227) target = $region20
        $region19: #{tpu_custom_call.1} parent=11 // pred_region
          _
        $region20: #{tpu_custom_call.1} parent=11 // pred_fallthru
          _
        // Predicated region
        $region21: #{tpu_custom_call.1} parent=11 // pred_check
          %p230 = pneg %p110
        $region22: #{tpu_custom_call.1} parent=11 // pred_check_branch
          %232 = sbr.rel (%p230) target = $region24
        $region23: #{tpu_custom_call.1} parent=11 // pred_region
          %s234 = ssub.s32 2048, 2048
          %235 = vsyncadd [#allocation6], %s234
          %s236 = sshll.u32 [#allocation7], 4
          %s237 = int_to_ptr.vmem [resolvable:$true] %s236
          %242 = dma.hbm_to_vmem [thread:$0]  %s3, 2048, %s237, [#allocation6], 64, 64, 4
        $region24: #{tpu_custom_call.1} parent=11 // pred_fallthru
          _
        // Predicated region
        $region25: #{tpu_custom_call.1} parent=11 // pred_check
          %p243 = pneg %p131
        $region26: #{tpu_custom_call.1} parent=11 // pred_check_branch
          %245 = sbr.rel (%p243) target = $region28
        $region27: #{tpu_custom_call.1} parent=11 // pred_region
          _
        $region28: #{tpu_custom_call.1} parent=11 // pred_fallthru
          _
        // Predicated region
        $region29: #{tpu_custom_call.1} parent=11 // pred_check
          %p246 = pneg %p152
        $region30: #{tpu_custom_call.1} parent=11 // pred_check_branch
          %248 = sbr.rel (%p246) target = $region32
        $region31: #{tpu_custom_call.1} parent=11 // pred_region
          %s250 = ssub.s32 1024, 1024
          %251 = vsyncadd [#allocation9], %s250
          %s252 = sshll.u32 [#allocation8], 4
          %s253 = int_to_ptr.vmem [resolvable:$true] %s252
          %258 = dma.hbm_to_vmem [thread:$0]  %s5, 1024, %s253, [#allocation9], 64, 64, 4
        $region32: #{tpu_custom_call.1} parent=11 // pred_fallthru
          _
        // Predicated region
        $region33: #{tpu_custom_call.1} parent=11 // pred_check
          %p259 = pneg %p173
        $region34: #{tpu_custom_call.1} parent=11 // pred_check_branch
          %261 = sbr.rel (%p259) target = $region36
        $region35: #{tpu_custom_call.1} parent=11 // pred_region
          _
        $region36: #{tpu_custom_call.1} parent=11 // pred_fallthru
          _
      $region12: #{tpu_custom_call.1} parent=5 // pred_fallthru
        _
      %p262 = scmp.lt.s32.totalorder %s21, 2
      // Predicated region
      $region37: #{tpu_custom_call.1} parent=5 // pred_check
        %p263 = pneg %p262
      $region38: #{tpu_custom_call.1} parent=5 // pred_check_branch
        %265 = sbr.rel (%p263) target = $region40
      $region39: #{tpu_custom_call.1} parent=5 // pred_region
        // Predicated region
        $region41: #{tpu_custom_call.1} parent=39 // pred_check
          %p266 = pneg %p41
        $region42: #{tpu_custom_call.1} parent=39 // pred_check_branch
          %268 = sbr.rel (%p266) target = $region44
        $region43: #{tpu_custom_call.1} parent=39 // pred_region
          %s269 = sand.u32 %s31, 1
          %s270 = scalar_lea.sflag [#allocation3], %s269
          %s271 = sand.u32 %s31, 1
          %s272 = smul.addr %s271, 512
          %s273 = scalar_lea.vmem [#allocation2], %s272
          %s274 = smul.u32 16, %s21
          %s276 = ssub.s32 8192, 8192
          %277 = vsyncadd %s270, %s276
          %s278 = smul.addr %s274, 8
          %s279 = smul.addr %s278, 64
          %s280 = scalar_lea.hbm %s0, %s279
          %s281 = sshll.u32 %s273, 4
          %s282 = int_to_ptr.vmem [resolvable:$true] %s281
          %287 = dma.hbm_to_vmem [thread:$0]  %s280, 8192, %s282, %s270, 512, 512, 32
        $region44: #{tpu_custom_call.1} parent=39 // pred_fallthru
          _
      $region40: #{tpu_custom_call.1} parent=5 // pred_fallthru
        _
      %p288 = scmp.le.s32.totalorder 1, %s21
      %p289 = scmp.lt.s32.totalorder %s21, 3
      %p290 = pnand %p288, %p289
      %p291 = pneg %p290
      // Predicated region
      $region45: #{tpu_custom_call.1} parent=5 // pred_check
        _
      $region46: #{tpu_custom_call.1} parent=5 // pred_check_branch
        %293 = sbr.rel (%p290) target = $region48
      $region47: #{tpu_custom_call.1} parent=5 // pred_region
        %s294 = ssub.s32 %s21, 1
        %s295 = sand.u32 %s34, 1
        %s296 = scalar_lea.sflag [#allocation3], %s295
        %s297 = sand.u32 %s34, 1
        %s298 = smul.addr %s297, 512
        %s299 = scalar_lea.vmem [#allocation2], %s298
        // Predicated region
        $region49: #{tpu_custom_call.1} parent=47 // pred_check
          %p300 = pneg %p47
        $region50: #{tpu_custom_call.1} parent=47 // pred_check_branch
          %302 = sbr.rel (%p300) target = $region52
        $region51: #{tpu_custom_call.1} parent=47 // pred_region
          %303 = dma.done %s296, 8192
        $region52: #{tpu_custom_call.1} parent=47 // pred_fallthru
          _
        // Predicated region
        $region53: #{tpu_custom_call.1} parent=47 // pred_check
          %p304 = pneg %p68
        $region54: #{tpu_custom_call.1} parent=47 // pred_check_branch
          %306 = sbr.rel (%p304) target = $region56
        $region55: #{tpu_custom_call.1} parent=47 // pred_region
          %307 = dma.done [#allocation6], 16384
        $region56: #{tpu_custom_call.1} parent=47 // pred_fallthru
          _
        // Predicated region
        $region57: #{tpu_custom_call.1} parent=47 // pred_check
          %p308 = pneg %p110
        $region58: #{tpu_custom_call.1} parent=47 // pred_check_branch
          %310 = sbr.rel (%p308) target = $region60
        $region59: #{tpu_custom_call.1} parent=47 // pred_region
          %311 = dma.done [#allocation6], 2048
        $region60: #{tpu_custom_call.1} parent=47 // pred_fallthru
          _
        // Predicated region
        $region61: #{tpu_custom_call.1} parent=47 // pred_check
          %p312 = pneg %p152
        $region62: #{tpu_custom_call.1} parent=47 // pred_check_branch
          %314 = sbr.rel (%p312) target = $region64
        $region63: #{tpu_custom_call.1} parent=47 // pred_region
          %315 = dma.done [#allocation9], 1024
        $region64: #{tpu_custom_call.1} parent=47 // pred_fallthru
          _
        %s316 = sand.u32 %s34, 1
        %s317 = scalar_lea.sflag [#allocation3], %s316
        %s318 = sand.u32 %s34, 1
        %s319 = smul.addr %s318, 512
        %s320 = scalar_lea.vmem [#allocation2], %s319
        %p321 = pneg %p47
        %p322 = pneg %p44
        %p323 = pneg %p68
        %p324 = pneg %p65
        %p325 = pneg %p89
        %p326 = pneg %p86
        %p327 = pneg %p110
        %p328 = pneg %p107
        %p329 = pneg %p131
        %p330 = pneg %p128
        %p331 = pneg %p152
        %p332 = pneg %p149
        %p333 = pneg %p173
        %p334 = pneg %p170
        %p335 = pneg %p199
        %p336 = pneg %p196
        %s337 = sand.u32 %s186, 1
        %s338 = scalar_lea.sflag [#allocation4], %s337
        %s339 = sand.u32 %s186, 1
        %s340 = smul.addr %s339, 128
        %s341 = scalar_lea.vmem [#allocation10], %s340
        %s342 = smul.u32 16, %s26
        %s343 = smul.u32 16, %s26
        %v345 = vld [vmem:[%s299] sm:$0xff]
        %v346 = vld [vmem:[%s299 + $0x8] sm:$0xff]
        %v347 = vld [vmem:[%s299 + $0x10] sm:$0xff]
        %v348 = vld [vmem:[%s299 + $0x18] sm:$0xff]
        %v349 = vld [vmem:[%s299 + $0x20] sm:$0xff]
        %v350 = vld [vmem:[%s299 + $0x28] sm:$0xff]
        %v351 = vld [vmem:[%s299 + $0x30] sm:$0xff]
        %v352 = vld [vmem:[%s299 + $0x38] sm:$0xff]
        %v353 = vld [vmem:[%s299 + $0x40] sm:$0xff]
        %v354 = vld [vmem:[%s299 + $0x48] sm:$0xff]
        %v355 = vld [vmem:[%s299 + $0x50] sm:$0xff]
        %v356 = vld [vmem:[%s299 + $0x58] sm:$0xff]
        %v357 = vld [vmem:[%s299 + $0x60] sm:$0xff]
        %v358 = vld [vmem:[%s299 + $0x68] sm:$0xff]
        %v359 = vld [vmem:[%s299 + $0x70] sm:$0xff]
        %v360 = vld [vmem:[%s299 + $0x78] sm:$0xff]
        %v361 = vld [vmem:[%s299 + $0x80] sm:$0xff]
        %v362 = vld [vmem:[%s299 + $0x88] sm:$0xff]
        %v363 = vld [vmem:[%s299 + $0x90] sm:$0xff]
        %v364 = vld [vmem:[%s299 + $0x98] sm:$0xff]
        %v365 = vld [vmem:[%s299 + $0xa0] sm:$0xff]
        %v366 = vld [vmem:[%s299 + $0xa8] sm:$0xff]
        %v367 = vld [vmem:[%s299 + $0xb0] sm:$0xff]
        %v368 = vld [vmem:[%s299 + $0xb8] sm:$0xff]
        %v369 = vld [vmem:[%s299 + $0xc0] sm:$0xff]
        %v370 = vld [vmem:[%s299 + $0xc8] sm:$0xff]
        %v371 = vld [vmem:[%s299 + $0xd0] sm:$0xff]
        %v372 = vld [vmem:[%s299 + $0xd8] sm:$0xff]
        %v373 = vld [vmem:[%s299 + $0xe0] sm:$0xff]
        %v374 = vld [vmem:[%s299 + $0xe8] sm:$0xff]
        %v375 = vld [vmem:[%s299 + $0xf0] sm:$0xff]
        %v376 = vld [vmem:[%s299 + $0xf8] sm:$0xff]
        %v377 = vld [vmem:[%s299 + $0x100] sm:$0xff]
        %v378 = vld [vmem:[%s299 + $0x108] sm:$0xff]
        %v379 = vld [vmem:[%s299 + $0x110] sm:$0xff]
        %v380 = vld [vmem:[%s299 + $0x118] sm:$0xff]
        %v381 = vld [vmem:[%s299 + $0x120] sm:$0xff]
        %v382 = vld [vmem:[%s299 + $0x128] sm:$0xff]
        %v383 = vld [vmem:[%s299 + $0x130] sm:$0xff]
        %v384 = vld [vmem:[%s299 + $0x138] sm:$0xff]
        %v385 = vld [vmem:[%s299 + $0x140] sm:$0xff]
        %v386 = vld [vmem:[%s299 + $0x148] sm:$0xff]
        %v387 = vld [vmem:[%s299 + $0x150] sm:$0xff]
        %v388 = vld [vmem:[%s299 + $0x158] sm:$0xff]
        %v389 = vld [vmem:[%s299 + $0x160] sm:$0xff]
        %v390 = vld [vmem:[%s299 + $0x168] sm:$0xff]
        %v391 = vld [vmem:[%s299 + $0x170] sm:$0xff]
        %v392 = vld [vmem:[%s299 + $0x178] sm:$0xff]
        %v393 = vld [vmem:[%s299 + $0x180] sm:$0xff]
        %v394 = vld [vmem:[%s299 + $0x188] sm:$0xff]
        %v395 = vld [vmem:[%s299 + $0x190] sm:$0xff]
        %v396 = vld [vmem:[%s299 + $0x198] sm:$0xff]
        %v397 = vld [vmem:[%s299 + $0x1a0] sm:$0xff]
        %v398 = vld [vmem:[%s299 + $0x1a8] sm:$0xff]
        %v399 = vld [vmem:[%s299 + $0x1b0] sm:$0xff]
        %v400 = vld [vmem:[%s299 + $0x1b8] sm:$0xff]
        %v401 = vld [vmem:[%s299 + $0x1c0] sm:$0xff]
        %v402 = vld [vmem:[%s299 + $0x1c8] sm:$0xff]
        %v403 = vld [vmem:[%s299 + $0x1d0] sm:$0xff]
        %v404 = vld [vmem:[%s299 + $0x1d8] sm:$0xff]
        %v405 = vld [vmem:[%s299 + $0x1e0] sm:$0xff]
        %v406 = vld [vmem:[%s299 + $0x1e8] sm:$0xff]
        %v407 = vld [vmem:[%s299 + $0x1f0] sm:$0xff]
        %v408 = vld [vmem:[%s299 + $0x1f8] sm:$0xff]
        %v409 = vld [vmem:[#allocation5] sm:$0xff]
        %v410 = vld [vmem:[#allocation5 + $0x8] sm:$0xff]
        %v411 = vld [vmem:[#allocation5 + $0x10] sm:$0xff]
        %v412 = vld [vmem:[#allocation5 + $0x18] sm:$0xff]
        %v413 = vld [vmem:[#allocation5 + $0x20] sm:$0xff]
        %v414 = vld [vmem:[#allocation5 + $0x28] sm:$0xff]
        %v415 = vld [vmem:[#allocation5 + $0x30] sm:$0xff]
        %v416 = vld [vmem:[#allocation5 + $0x38] sm:$0xff]
        %v417 = vld [vmem:[#allocation5 + $0x40] sm:$0xff]
        %v418 = vld [vmem:[#allocation5 + $0x48] sm:$0xff]
        %v419 = vld [vmem:[#allocation5 + $0x50] sm:$0xff]
        %v420 = vld [vmem:[#allocation5 + $0x58] sm:$0xff]
        %v421 = vld [vmem:[#allocation5 + $0x60] sm:$0xff]
        %v422 = vld [vmem:[#allocation5 + $0x68] sm:$0xff]
        %v423 = vld [vmem:[#allocation5 + $0x70] sm:$0xff]
        %v424 = vld [vmem:[#allocation5 + $0x78] sm:$0xff]
        %v425 = vld [vmem:[#allocation5 + $0x80] sm:$0xff]
        %v426 = vld [vmem:[#allocation5 + $0x88] sm:$0xff]
        %v427 = vld [vmem:[#allocation5 + $0x90] sm:$0xff]
        %v428 = vld [vmem:[#allocation5 + $0x98] sm:$0xff]
        %v429 = vld [vmem:[#allocation5 + $0xa0] sm:$0xff]
        %v430 = vld [vmem:[#allocation5 + $0xa8] sm:$0xff]
        %v431 = vld [vmem:[#allocation5 + $0xb0] sm:$0xff]
        %v432 = vld [vmem:[#allocation5 + $0xb8] sm:$0xff]
        %v433 = vld [vmem:[#allocation5 + $0xc0] sm:$0xff]
        %v434 = vld [vmem:[#allocation5 + $0xc8] sm:$0xff]
        %v435 = vld [vmem:[#allocation5 + $0xd0] sm:$0xff]
        %v436 = vld [vmem:[#allocation5 + $0xd8] sm:$0xff]
        %v437 = vld [vmem:[#allocation5 + $0xe0] sm:$0xff]
        %v438 = vld [vmem:[#allocation5 + $0xe8] sm:$0xff]
        %v439 = vld [vmem:[#allocation5 + $0xf0] sm:$0xff]
        %v440 = vld [vmem:[#allocation5 + $0xf8] sm:$0xff]
        %v441 = vld [vmem:[#allocation5 + $0x100] sm:$0xff]
        %v442 = vld [vmem:[#allocation5 + $0x108] sm:$0xff]
        %v443 = vld [vmem:[#allocation5 + $0x110] sm:$0xff]
        %v444 = vld [vmem:[#allocation5 + $0x118] sm:$0xff]
        %v445 = vld [vmem:[#allocation5 + $0x120] sm:$0xff]
        %v446 = vld [vmem:[#allocation5 + $0x128] sm:$0xff]
        %v447 = vld [vmem:[#allocation5 + $0x130] sm:$0xff]
        %v448 = vld [vmem:[#allocation5 + $0x138] sm:$0xff]
        %v449 = vld [vmem:[#allocation5 + $0x140] sm:$0xff]
        %v450 = vld [vmem:[#allocation5 + $0x148] sm:$0xff]
        %v451 = vld [vmem:[#allocation5 + $0x150] sm:$0xff]
        %v452 = vld [vmem:[#allocation5 + $0x158] sm:$0xff]
        %v453 = vld [vmem:[#allocation5 + $0x160] sm:$0xff]
        %v454 = vld [vmem:[#allocation5 + $0x168] sm:$0xff]
        %v455 = vld [vmem:[#allocation5 + $0x170] sm:$0xff]
        %v456 = vld [vmem:[#allocation5 + $0x178] sm:$0xff]
        %v457 = vld [vmem:[#allocation5 + $0x180] sm:$0xff]
        %v458 = vld [vmem:[#allocation5 + $0x188] sm:$0xff]
        %v459 = vld [vmem:[#allocation5 + $0x190] sm:$0xff]
        %v460 = vld [vmem:[#allocation5 + $0x198] sm:$0xff]
        %v461 = vld [vmem:[#allocation5 + $0x1a0] sm:$0xff]
        %v462 = vld [vmem:[#allocation5 + $0x1a8] sm:$0xff]
        %v463 = vld [vmem:[#allocation5 + $0x1b0] sm:$0xff]
        %v464 = vld [vmem:[#allocation5 + $0x1b8] sm:$0xff]
        %v465 = vld [vmem:[#allocation5 + $0x1c0] sm:$0xff]
        %v466 = vld [vmem:[#allocation5 + $0x1c8] sm:$0xff]
        %v467 = vld [vmem:[#allocation5 + $0x1d0] sm:$0xff]
        %v468 = vld [vmem:[#allocation5 + $0x1d8] sm:$0xff]
        %v469 = vld [vmem:[#allocation5 + $0x1e0] sm:$0xff]
        %v470 = vld [vmem:[#allocation5 + $0x1e8] sm:$0xff]
        %v471 = vld [vmem:[#allocation5 + $0x1f0] sm:$0xff]
        %v472 = vld [vmem:[#allocation5 + $0x1f8] sm:$0xff]
        %v473 = vld [vmem:[#allocation5 + $0x200] sm:$0xff]
        %v474 = vld [vmem:[#allocation5 + $0x208] sm:$0xff]
        %v475 = vld [vmem:[#allocation5 + $0x210] sm:$0xff]
        %v476 = vld [vmem:[#allocation5 + $0x218] sm:$0xff]
        %v477 = vld [vmem:[#allocation5 + $0x220] sm:$0xff]
        %v478 = vld [vmem:[#allocation5 + $0x228] sm:$0xff]
        %v479 = vld [vmem:[#allocation5 + $0x230] sm:$0xff]
        %v480 = vld [vmem:[#allocation5 + $0x238] sm:$0xff]
        %v481 = vld [vmem:[#allocation5 + $0x240] sm:$0xff]
        %v482 = vld [vmem:[#allocation5 + $0x248] sm:$0xff]
        %v483 = vld [vmem:[#allocation5 + $0x250] sm:$0xff]
        %v484 = vld [vmem:[#allocation5 + $0x258] sm:$0xff]
        %v485 = vld [vmem:[#allocation5 + $0x260] sm:$0xff]
        %v486 = vld [vmem:[#allocation5 + $0x268] sm:$0xff]
        %v487 = vld [vmem:[#allocation5 + $0x270] sm:$0xff]
        %v488 = vld [vmem:[#allocation5 + $0x278] sm:$0xff]
        %v489 = vld [vmem:[#allocation5 + $0x280] sm:$0xff]
        %v490 = vld [vmem:[#allocation5 + $0x288] sm:$0xff]
        %v491 = vld [vmem:[#allocation5 + $0x290] sm:$0xff]
        %v492 = vld [vmem:[#allocation5 + $0x298] sm:$0xff]
        %v493 = vld [vmem:[#allocation5 + $0x2a0] sm:$0xff]
        %v494 = vld [vmem:[#allocation5 + $0x2a8] sm:$0xff]
        %v495 = vld [vmem:[#allocation5 + $0x2b0] sm:$0xff]
        %v496 = vld [vmem:[#allocation5 + $0x2b8] sm:$0xff]
        %v497 = vld [vmem:[#allocation5 + $0x2c0] sm:$0xff]
        %v498 = vld [vmem:[#allocation5 + $0x2c8] sm:$0xff]
        %v499 = vld [vmem:[#allocation5 + $0x2d0] sm:$0xff]
        %v500 = vld [vmem:[#allocation5 + $0x2d8] sm:$0xff]
        %v501 = vld [vmem:[#allocation5 + $0x2e0] sm:$0xff]
        %v502 = vld [vmem:[#allocation5 + $0x2e8] sm:$0xff]
        %v503 = vld [vmem:[#allocation5 + $0x2f0] sm:$0xff]
        %v504 = vld [vmem:[#allocation5 + $0x2f8] sm:$0xff]
        %v505 = vld [vmem:[#allocation5 + $0x300] sm:$0xff]
        %v506 = vld [vmem:[#allocation5 + $0x308] sm:$0xff]
        %v507 = vld [vmem:[#allocation5 + $0x310] sm:$0xff]
        %v508 = vld [vmem:[#allocation5 + $0x318] sm:$0xff]
        %v509 = vld [vmem:[#allocation5 + $0x320] sm:$0xff]
        %v510 = vld [vmem:[#allocation5 + $0x328] sm:$0xff]
        %v511 = vld [vmem:[#allocation5 + $0x330] sm:$0xff]
        %v512 = vld [vmem:[#allocation5 + $0x338] sm:$0xff]
        %v513 = vld [vmem:[#allocation5 + $0x340] sm:$0xff]
        %v514 = vld [vmem:[#allocation5 + $0x348] sm:$0xff]
        %v515 = vld [vmem:[#allocation5 + $0x350] sm:$0xff]
        %v516 = vld [vmem:[#allocation5 + $0x358] sm:$0xff]
        %v517 = vld [vmem:[#allocation5 + $0x360] sm:$0xff]
        %v518 = vld [vmem:[#allocation5 + $0x368] sm:$0xff]
        %v519 = vld [vmem:[#allocation5 + $0x370] sm:$0xff]
        %v520 = vld [vmem:[#allocation5 + $0x378] sm:$0xff]
        %v521 = vld [vmem:[#allocation5 + $0x380] sm:$0xff]
        %v522 = vld [vmem:[#allocation5 + $0x388] sm:$0xff]
        %v523 = vld [vmem:[#allocation5 + $0x390] sm:$0xff]
        %v524 = vld [vmem:[#allocation5 + $0x398] sm:$0xff]
        %v525 = vld [vmem:[#allocation5 + $0x3a0] sm:$0xff]
        %v526 = vld [vmem:[#allocation5 + $0x3a8] sm:$0xff]
        %v527 = vld [vmem:[#allocation5 + $0x3b0] sm:$0xff]
        %v528 = vld [vmem:[#allocation5 + $0x3b8] sm:$0xff]
        %v529 = vld [vmem:[#allocation5 + $0x3c0] sm:$0xff]
        %v530 = vld [vmem:[#allocation5 + $0x3c8] sm:$0xff]
        %v531 = vld [vmem:[#allocation5 + $0x3d0] sm:$0xff]
        %v532 = vld [vmem:[#allocation5 + $0x3d8] sm:$0xff]
        %v533 = vld [vmem:[#allocation5 + $0x3e0] sm:$0xff]
        %v534 = vld [vmem:[#allocation5 + $0x3e8] sm:$0xff]
        %v535 = vld [vmem:[#allocation5 + $0x3f0] sm:$0xff]
        %v536 = vld [vmem:[#allocation5 + $0x3f8] sm:$0xff]
        %v537 = vld [vmem:[%s2] sm:$0x3]
        %v539 = vlaneseq
        %v540 = vshrl.u32 %v539, 7
        %v541 = vsub.s32 0, %v540
        %v542 = vrot.slane %v537, %v541
        %v543 = vlaneseq
        %v544 = vshrl.u32 %v543, 7
        %v545 = vsub.s32 1, %v544
        %v546 = vrot.slane %v537, %v545
        %v613 = vunpack.c.l.b16 %v345
        %v614 = vunpack.c.h.b16 %v345
        %v615 = vunpack.c.l.b16 %v346
        %v616 = vunpack.c.h.b16 %v346
        %v617 = vunpack.c.l.b16 %v347
        %v618 = vunpack.c.h.b16 %v347
        %v619 = vunpack.c.l.b16 %v348
        %v620 = vunpack.c.h.b16 %v348
        %v621 = vunpack.c.l.b16 %v349
        %v622 = vunpack.c.h.b16 %v349
        %v623 = vunpack.c.l.b16 %v350
        %v624 = vunpack.c.h.b16 %v350
        %v625 = vunpack.c.l.b16 %v351
        %v626 = vunpack.c.h.b16 %v351
        %v627 = vunpack.c.l.b16 %v352
        %v628 = vunpack.c.h.b16 %v352
        %v629 = vunpack.c.l.b16 %v353
        %v630 = vunpack.c.h.b16 %v353
        %v631 = vunpack.c.l.b16 %v354
        %v632 = vunpack.c.h.b16 %v354
        %v633 = vunpack.c.l.b16 %v355
        %v634 = vunpack.c.h.b16 %v355
        %v635 = vunpack.c.l.b16 %v356
        %v636 = vunpack.c.h.b16 %v356
        %v637 = vunpack.c.l.b16 %v357
        %v638 = vunpack.c.h.b16 %v357
        %v639 = vunpack.c.l.b16 %v358
        %v640 = vunpack.c.h.b16 %v358
        %v641 = vunpack.c.l.b16 %v359
        %v642 = vunpack.c.h.b16 %v359
        %v643 = vunpack.c.l.b16 %v360
        %v644 = vunpack.c.h.b16 %v360
        %v645 = vunpack.c.l.b16 %v361
        %v646 = vunpack.c.h.b16 %v361
        %v647 = vunpack.c.l.b16 %v362
        %v648 = vunpack.c.h.b16 %v362
        %v649 = vunpack.c.l.b16 %v363
        %v650 = vunpack.c.h.b16 %v363
        %v651 = vunpack.c.l.b16 %v364
        %v652 = vunpack.c.h.b16 %v364
        %v653 = vunpack.c.l.b16 %v365
        %v654 = vunpack.c.h.b16 %v365
        %v655 = vunpack.c.l.b16 %v366
        %v656 = vunpack.c.h.b16 %v366
        %v657 = vunpack.c.l.b16 %v367
        %v658 = vunpack.c.h.b16 %v367
        %v659 = vunpack.c.l.b16 %v368
        %v660 = vunpack.c.h.b16 %v368
        %v661 = vunpack.c.l.b16 %v369
        %v662 = vunpack.c.h.b16 %v369
        %v663 = vunpack.c.l.b16 %v370
        %v664 = vunpack.c.h.b16 %v370
        %v665 = vunpack.c.l.b16 %v371
        %v666 = vunpack.c.h.b16 %v371
        %v667 = vunpack.c.l.b16 %v372
        %v668 = vunpack.c.h.b16 %v372
        %v669 = vunpack.c.l.b16 %v373
        %v670 = vunpack.c.h.b16 %v373
        %v671 = vunpack.c.l.b16 %v374
        %v672 = vunpack.c.h.b16 %v374
        %v673 = vunpack.c.l.b16 %v375
        %v674 = vunpack.c.h.b16 %v375
        %v675 = vunpack.c.l.b16 %v376
        %v676 = vunpack.c.h.b16 %v376
        %v677 = vunpack.c.l.b16 %v377
        %v678 = vunpack.c.h.b16 %v377
        %v679 = vunpack.c.l.b16 %v378
        %v680 = vunpack.c.h.b16 %v378
        %v681 = vunpack.c.l.b16 %v379
        %v682 = vunpack.c.h.b16 %v379
        %v683 = vunpack.c.l.b16 %v380
        %v684 = vunpack.c.h.b16 %v380
        %v685 = vunpack.c.l.b16 %v381
        %v686 = vunpack.c.h.b16 %v381
        %v687 = vunpack.c.l.b16 %v382
        %v688 = vunpack.c.h.b16 %v382
        %v689 = vunpack.c.l.b16 %v383
        %v690 = vunpack.c.h.b16 %v383
        %v691 = vunpack.c.l.b16 %v384
        %v692 = vunpack.c.h.b16 %v384
        %v693 = vunpack.c.l.b16 %v385
        %v694 = vunpack.c.h.b16 %v385
        %v695 = vunpack.c.l.b16 %v386
        %v696 = vunpack.c.h.b16 %v386
        %v697 = vunpack.c.l.b16 %v387
        %v698 = vunpack.c.h.b16 %v387
        %v699 = vunpack.c.l.b16 %v388
        %v700 = vunpack.c.h.b16 %v388
        %v701 = vunpack.c.l.b16 %v389
        %v702 = vunpack.c.h.b16 %v389
        %v703 = vunpack.c.l.b16 %v390
        %v704 = vunpack.c.h.b16 %v390
        %v705 = vunpack.c.l.b16 %v391
        %v706 = vunpack.c.h.b16 %v391
        %v707 = vunpack.c.l.b16 %v392
        %v708 = vunpack.c.h.b16 %v392
        %v709 = vunpack.c.l.b16 %v393
        %v710 = vunpack.c.h.b16 %v393
        %v711 = vunpack.c.l.b16 %v394
        %v712 = vunpack.c.h.b16 %v394
        %v713 = vunpack.c.l.b16 %v395
        %v714 = vunpack.c.h.b16 %v395
        %v715 = vunpack.c.l.b16 %v396
        %v716 = vunpack.c.h.b16 %v396
        %v717 = vunpack.c.l.b16 %v397
        %v718 = vunpack.c.h.b16 %v397
        %v719 = vunpack.c.l.b16 %v398
        %v720 = vunpack.c.h.b16 %v398
        %v721 = vunpack.c.l.b16 %v399
        %v722 = vunpack.c.h.b16 %v399
        %v723 = vunpack.c.l.b16 %v400
        %v724 = vunpack.c.h.b16 %v400
        %v725 = vunpack.c.l.b16 %v401
        %v726 = vunpack.c.h.b16 %v401
        %v727 = vunpack.c.l.b16 %v402
        %v728 = vunpack.c.h.b16 %v402
        %v729 = vunpack.c.l.b16 %v403
        %v730 = vunpack.c.h.b16 %v403
        %v731 = vunpack.c.l.b16 %v404
        %v732 = vunpack.c.h.b16 %v404
        %v733 = vunpack.c.l.b16 %v405
        %v734 = vunpack.c.h.b16 %v405
        %v735 = vunpack.c.l.b16 %v406
        %v736 = vunpack.c.h.b16 %v406
        %v737 = vunpack.c.l.b16 %v407
        %v738 = vunpack.c.h.b16 %v407
        %v739 = vunpack.c.l.b16 %v408
        %v740 = vunpack.c.h.b16 %v408
        %v741 = vpack.c.b16 %v621, %v613
        %v742 = vpack.c.b16 %v622, %v614
        %v743 = vpack.c.b16 %v623, %v615
        %v744 = vpack.c.b16 %v624, %v616
        %v745 = vpack.c.b16 %v625, %v617
        %v746 = vpack.c.b16 %v626, %v618
        %v747 = vpack.c.b16 %v627, %v619
        %v748 = vpack.c.b16 %v628, %v620
        %v749 = vpack.c.b16 %v637, %v629
        %v750 = vpack.c.b16 %v638, %v630
        %v751 = vpack.c.b16 %v639, %v631
        %v752 = vpack.c.b16 %v640, %v632
        %v753 = vpack.c.b16 %v641, %v633
        %v754 = vpack.c.b16 %v642, %v634
        %v755 = vpack.c.b16 %v643, %v635
        %v756 = vpack.c.b16 %v644, %v636
        %v757 = vpack.c.b16 %v653, %v645
        %v758 = vpack.c.b16 %v654, %v646
        %v759 = vpack.c.b16 %v655, %v647
        %v760 = vpack.c.b16 %v656, %v648
        %v761 = vpack.c.b16 %v657, %v649
        %v762 = vpack.c.b16 %v658, %v650
        %v763 = vpack.c.b16 %v659, %v651
        %v764 = vpack.c.b16 %v660, %v652
        %v765 = vpack.c.b16 %v669, %v661
        %v766 = vpack.c.b16 %v670, %v662
        %v767 = vpack.c.b16 %v671, %v663
        %v768 = vpack.c.b16 %v672, %v664
        %v769 = vpack.c.b16 %v673, %v665
        %v770 = vpack.c.b16 %v674, %v666
        %v771 = vpack.c.b16 %v675, %v667
        %v772 = vpack.c.b16 %v676, %v668
        %v773 = vpack.c.b16 %v685, %v677
        %v774 = vpack.c.b16 %v686, %v678
        %v775 = vpack.c.b16 %v687, %v679
        %v776 = vpack.c.b16 %v688, %v680
        %v777 = vpack.c.b16 %v689, %v681
        %v778 = vpack.c.b16 %v690, %v682
        %v779 = vpack.c.b16 %v691, %v683
        %v780 = vpack.c.b16 %v692, %v684
        %v781 = vpack.c.b16 %v701, %v693
        %v782 = vpack.c.b16 %v702, %v694
        %v783 = vpack.c.b16 %v703, %v695
        %v784 = vpack.c.b16 %v704, %v696
        %v785 = vpack.c.b16 %v705, %v697
        %v786 = vpack.c.b16 %v706, %v698
        %v787 = vpack.c.b16 %v707, %v699
        %v788 = vpack.c.b16 %v708, %v700
        %v789 = vpack.c.b16 %v717, %v709
        %v790 = vpack.c.b16 %v718, %v710
        %v791 = vpack.c.b16 %v719, %v711
        %v792 = vpack.c.b16 %v720, %v712
        %v793 = vpack.c.b16 %v721, %v713
        %v794 = vpack.c.b16 %v722, %v714
        %v795 = vpack.c.b16 %v723, %v715
        %v796 = vpack.c.b16 %v724, %v716
        %v797 = vpack.c.b16 %v733, %v725
        %v798 = vpack.c.b16 %v734, %v726
        %v799 = vpack.c.b16 %v735, %v727
        %v800 = vpack.c.b16 %v736, %v728
        %v801 = vpack.c.b16 %v737, %v729
        %v802 = vpack.c.b16 %v738, %v730
        %v803 = vpack.c.b16 %v739, %v731
        %v804 = vpack.c.b16 %v740, %v732
        %v997 = vunpack.c.l.b16 %v409
        %v998 = vunpack.c.h.b16 %v409
        %v999 = vunpack.c.l.b16 %v410
        %v1000 = vunpack.c.h.b16 %v410
        %v1001 = vunpack.c.l.b16 %v411
        %v1002 = vunpack.c.h.b16 %v411
        %v1003 = vunpack.c.l.b16 %v412
        %v1004 = vunpack.c.h.b16 %v412
        %v1005 = vunpack.c.l.b16 %v413
        %v1006 = vunpack.c.h.b16 %v413
        %v1007 = vunpack.c.l.b16 %v414
        %v1008 = vunpack.c.h.b16 %v414
        %v1009 = vunpack.c.l.b16 %v415
        %v1010 = vunpack.c.h.b16 %v415
        %v1011 = vunpack.c.l.b16 %v416
        %v1012 = vunpack.c.h.b16 %v416
        %v1013 = vunpack.c.l.b16 %v417
        %v1014 = vunpack.c.h.b16 %v417
        %v1015 = vunpack.c.l.b16 %v418
        %v1016 = vunpack.c.h.b16 %v418
        %v1017 = vunpack.c.l.b16 %v419
        %v1018 = vunpack.c.h.b16 %v419
        %v1019 = vunpack.c.l.b16 %v420
        %v1020 = vunpack.c.h.b16 %v420
        %v1021 = vunpack.c.l.b16 %v421
        %v1022 = vunpack.c.h.b16 %v421
        %v1023 = vunpack.c.l.b16 %v422
        %v1024 = vunpack.c.h.b16 %v422
        %v1025 = vunpack.c.l.b16 %v423
        %v1026 = vunpack.c.h.b16 %v423
        %v1027 = vunpack.c.l.b16 %v424
        %v1028 = vunpack.c.h.b16 %v424
        %v1029 = vunpack.c.l.b16 %v425
        %v1030 = vunpack.c.h.b16 %v425
        %v1031 = vunpack.c.l.b16 %v426
        %v1032 = vunpack.c.h.b16 %v426
        %v1033 = vunpack.c.l.b16 %v427
        %v1034 = vunpack.c.h.b16 %v427
        %v1035 = vunpack.c.l.b16 %v428
        %v1036 = vunpack.c.h.b16 %v428
        %v1037 = vunpack.c.l.b16 %v429
        %v1038 = vunpack.c.h.b16 %v429
        %v1039 = vunpack.c.l.b16 %v430
        %v1040 = vunpack.c.h.b16 %v430
        %v1041 = vunpack.c.l.b16 %v431
        %v1042 = vunpack.c.h.b16 %v431
        %v1043 = vunpack.c.l.b16 %v432
        %v1044 = vunpack.c.h.b16 %v432
        %v1045 = vunpack.c.l.b16 %v433
        %v1046 = vunpack.c.h.b16 %v433
        %v1047 = vunpack.c.l.b16 %v434
        %v1048 = vunpack.c.h.b16 %v434
        %v1049 = vunpack.c.l.b16 %v435
        %v1050 = vunpack.c.h.b16 %v435
        %v1051 = vunpack.c.l.b16 %v436
        %v1052 = vunpack.c.h.b16 %v436
        %v1053 = vunpack.c.l.b16 %v437
        %v1054 = vunpack.c.h.b16 %v437
        %v1055 = vunpack.c.l.b16 %v438
        %v1056 = vunpack.c.h.b16 %v438
        %v1057 = vunpack.c.l.b16 %v439
        %v1058 = vunpack.c.h.b16 %v439
        %v1059 = vunpack.c.l.b16 %v440
        %v1060 = vunpack.c.h.b16 %v440
        %v1061 = vunpack.c.l.b16 %v441
        %v1062 = vunpack.c.h.b16 %v441
        %v1063 = vunpack.c.l.b16 %v442
        %v1064 = vunpack.c.h.b16 %v442
        %v1065 = vunpack.c.l.b16 %v443
        %v1066 = vunpack.c.h.b16 %v443
        %v1067 = vunpack.c.l.b16 %v444
        %v1068 = vunpack.c.h.b16 %v444
        %v1069 = vunpack.c.l.b16 %v445
        %v1070 = vunpack.c.h.b16 %v445
        %v1071 = vunpack.c.l.b16 %v446
        %v1072 = vunpack.c.h.b16 %v446
        %v1073 = vunpack.c.l.b16 %v447
        %v1074 = vunpack.c.h.b16 %v447
        %v1075 = vunpack.c.l.b16 %v448
        %v1076 = vunpack.c.h.b16 %v448
        %v1077 = vunpack.c.l.b16 %v449
        %v1078 = vunpack.c.h.b16 %v449
        %v1079 = vunpack.c.l.b16 %v450
        %v1080 = vunpack.c.h.b16 %v450
        %v1081 = vunpack.c.l.b16 %v451
        %v1082 = vunpack.c.h.b16 %v451
        %v1083 = vunpack.c.l.b16 %v452
        %v1084 = vunpack.c.h.b16 %v452
        %v1085 = vunpack.c.l.b16 %v453
        %v1086 = vunpack.c.h.b16 %v453
        %v1087 = vunpack.c.l.b16 %v454
        %v1088 = vunpack.c.h.b16 %v454
        %v1089 = vunpack.c.l.b16 %v455
        %v1090 = vunpack.c.h.b16 %v455
        %v1091 = vunpack.c.l.b16 %v456
        %v1092 = vunpack.c.h.b16 %v456
        %v1093 = vunpack.c.l.b16 %v457
        %v1094 = vunpack.c.h.b16 %v457
        %v1095 = vunpack.c.l.b16 %v458
        %v1096 = vunpack.c.h.b16 %v458
        %v1097 = vunpack.c.l.b16 %v459
        %v1098 = vunpack.c.h.b16 %v459
        %v1099 = vunpack.c.l.b16 %v460
        %v1100 = vunpack.c.h.b16 %v460
        %v1101 = vunpack.c.l.b16 %v461
        %v1102 = vunpack.c.h.b16 %v461
        %v1103 = vunpack.c.l.b16 %v462
        %v1104 = vunpack.c.h.b16 %v462
        %v1105 = vunpack.c.l.b16 %v463
        %v1106 = vunpack.c.h.b16 %v463
        %v1107 = vunpack.c.l.b16 %v464
        %v1108 = vunpack.c.h.b16 %v464
        %v1109 = vunpack.c.l.b16 %v465
        %v1110 = vunpack.c.h.b16 %v465
        %v1111 = vunpack.c.l.b16 %v466
        %v1112 = vunpack.c.h.b16 %v466
        %v1113 = vunpack.c.l.b16 %v467
        %v1114 = vunpack.c.h.b16 %v467
        %v1115 = vunpack.c.l.b16 %v468
        %v1116 = vunpack.c.h.b16 %v468
        %v1117 = vunpack.c.l.b16 %v469
        %v1118 = vunpack.c.h.b16 %v469
        %v1119 = vunpack.c.l.b16 %v470
        %v1120 = vunpack.c.h.b16 %v470
        %v1121 = vunpack.c.l.b16 %v471
        %v1122 = vunpack.c.h.b16 %v471
        %v1123 = vunpack.c.l.b16 %v472
        %v1124 = vunpack.c.h.b16 %v472
        %v1125 = vunpack.c.l.b16 %v473
        %v1126 = vunpack.c.h.b16 %v473
        %v1127 = vunpack.c.l.b16 %v474
        %v1128 = vunpack.c.h.b16 %v474
        %v1129 = vunpack.c.l.b16 %v475
        %v1130 = vunpack.c.h.b16 %v475
        %v1131 = vunpack.c.l.b16 %v476
        %v1132 = vunpack.c.h.b16 %v476
        %v1133 = vunpack.c.l.b16 %v477
        %v1134 = vunpack.c.h.b16 %v477
        %v1135 = vunpack.c.l.b16 %v478
        %v1136 = vunpack.c.h.b16 %v478
        %v1137 = vunpack.c.l.b16 %v479
        %v1138 = vunpack.c.h.b16 %v479
        %v1139 = vunpack.c.l.b16 %v480
        %v1140 = vunpack.c.h.b16 %v480
        %v1141 = vunpack.c.l.b16 %v481
        %v1142 = vunpack.c.h.b16 %v481
        %v1143 = vunpack.c.l.b16 %v482
        %v1144 = vunpack.c.h.b16 %v482
        %v1145 = vunpack.c.l.b16 %v483
        %v1146 = vunpack.c.h.b16 %v483
        %v1147 = vunpack.c.l.b16 %v484
        %v1148 = vunpack.c.h.b16 %v484
        %v1149 = vunpack.c.l.b16 %v485
        %v1150 = vunpack.c.h.b16 %v485
        %v1151 = vunpack.c.l.b16 %v486
        %v1152 = vunpack.c.h.b16 %v486
        %v1153 = vunpack.c.l.b16 %v487
        %v1154 = vunpack.c.h.b16 %v487
        %v1155 = vunpack.c.l.b16 %v488
        %v1156 = vunpack.c.h.b16 %v488
        %v1157 = vunpack.c.l.b16 %v489
        %v1158 = vunpack.c.h.b16 %v489
        %v1159 = vunpack.c.l.b16 %v490
        %v1160 = vunpack.c.h.b16 %v490
        %v1161 = vunpack.c.l.b16 %v491
        %v1162 = vunpack.c.h.b16 %v491
        %v1163 = vunpack.c.l.b16 %v492
        %v1164 = vunpack.c.h.b16 %v492
        %v1165 = vunpack.c.l.b16 %v493
        %v1166 = vunpack.c.h.b16 %v493
        %v1167 = vunpack.c.l.b16 %v494
        %v1168 = vunpack.c.h.b16 %v494
        %v1169 = vunpack.c.l.b16 %v495
        %v1170 = vunpack.c.h.b16 %v495
        %v1171 = vunpack.c.l.b16 %v496
        %v1172 = vunpack.c.h.b16 %v496
        %v1173 = vunpack.c.l.b16 %v497
        %v1174 = vunpack.c.h.b16 %v497
        %v1175 = vunpack.c.l.b16 %v498
        %v1176 = vunpack.c.h.b16 %v498
        %v1177 = vunpack.c.l.b16 %v499
        %v1178 = vunpack.c.h.b16 %v499
        %v1179 = vunpack.c.l.b16 %v500
        %v1180 = vunpack.c.h.b16 %v500
        %v1181 = vunpack.c.l.b16 %v501
        %v1182 = vunpack.c.h.b16 %v501
        %v1183 = vunpack.c.l.b16 %v502
        %v1184 = vunpack.c.h.b16 %v502
        %v1185 = vunpack.c.l.b16 %v503
        %v1186 = vunpack.c.h.b16 %v503
        %v1187 = vunpack.c.l.b16 %v504
        %v1188 = vunpack.c.h.b16 %v504
        %v1189 = vunpack.c.l.b16 %v505
        %v1190 = vunpack.c.h.b16 %v505
        %v1191 = vunpack.c.l.b16 %v506
        %v1192 = vunpack.c.h.b16 %v506
        %v1193 = vunpack.c.l.b16 %v507
        %v1194 = vunpack.c.h.b16 %v507
        %v1195 = vunpack.c.l.b16 %v508
        %v1196 = vunpack.c.h.b16 %v508
        %v1197 = vunpack.c.l.b16 %v509
        %v1198 = vunpack.c.h.b16 %v509
        %v1199 = vunpack.c.l.b16 %v510
        %v1200 = vunpack.c.h.b16 %v510
        %v1201 = vunpack.c.l.b16 %v511
        %v1202 = vunpack.c.h.b16 %v511
        %v1203 = vunpack.c.l.b16 %v512
        %v1204 = vunpack.c.h.b16 %v512
        %v1205 = vunpack.c.l.b16 %v513
        %v1206 = vunpack.c.h.b16 %v513
        %v1207 = vunpack.c.l.b16 %v514
        %v1208 = vunpack.c.h.b16 %v514
        %v1209 = vunpack.c.l.b16 %v515
        %v1210 = vunpack.c.h.b16 %v515
        %v1211 = vunpack.c.l.b16 %v516
        %v1212 = vunpack.c.h.b16 %v516
        %v1213 = vunpack.c.l.b16 %v517
        %v1214 = vunpack.c.h.b16 %v517
        %v1215 = vunpack.c.l.b16 %v518
        %v1216 = vunpack.c.h.b16 %v518
        %v1217 = vunpack.c.l.b16 %v519
        %v1218 = vunpack.c.h.b16 %v519
        %v1219 = vunpack.c.l.b16 %v520
        %v1220 = vunpack.c.h.b16 %v520
        %v1221 = vunpack.c.l.b16 %v521
        %v1222 = vunpack.c.h.b16 %v521
        %v1223 = vunpack.c.l.b16 %v522
        %v1224 = vunpack.c.h.b16 %v522
        %v1225 = vunpack.c.l.b16 %v523
        %v1226 = vunpack.c.h.b16 %v523
        %v1227 = vunpack.c.l.b16 %v524
        %v1228 = vunpack.c.h.b16 %v524
        %v1229 = vunpack.c.l.b16 %v525
        %v1230 = vunpack.c.h.b16 %v525
        %v1231 = vunpack.c.l.b16 %v526
        %v1232 = vunpack.c.h.b16 %v526
        %v1233 = vunpack.c.l.b16 %v527
        %v1234 = vunpack.c.h.b16 %v527
        %v1235 = vunpack.c.l.b16 %v528
        %v1236 = vunpack.c.h.b16 %v528
        %v1237 = vunpack.c.l.b16 %v529
        %v1238 = vunpack.c.h.b16 %v529
        %v1239 = vunpack.c.l.b16 %v530
        %v1240 = vunpack.c.h.b16 %v530
        %v1241 = vunpack.c.l.b16 %v531
        %v1242 = vunpack.c.h.b16 %v531
        %v1243 = vunpack.c.l.b16 %v532
        %v1244 = vunpack.c.h.b16 %v532
        %v1245 = vunpack.c.l.b16 %v533
        %v1246 = vunpack.c.h.b16 %v533
        %v1247 = vunpack.c.l.b16 %v534
        %v1248 = vunpack.c.h.b16 %v534
        %v1249 = vunpack.c.l.b16 %v535
        %v1250 = vunpack.c.h.b16 %v535
        %v1251 = vunpack.c.l.b16 %v536
        %v1252 = vunpack.c.h.b16 %v536
        %v1253 = vpack.c.b16 %v999, %v997
        %v1254 = vpack.c.b16 %v1000, %v998
        %v1255 = vpack.c.b16 %v1003, %v1001
        %v1256 = vpack.c.b16 %v1004, %v1002
        %v1257 = vpack.c.b16 %v1007, %v1005
        %v1258 = vpack.c.b16 %v1008, %v1006
        %v1259 = vpack.c.b16 %v1011, %v1009
        %v1260 = vpack.c.b16 %v1012, %v1010
        %v1261 = vpack.c.b16 %v1015, %v1013
        %v1262 = vpack.c.b16 %v1016, %v1014
        %v1263 = vpack.c.b16 %v1019, %v1017
        %v1264 = vpack.c.b16 %v1020, %v1018
        %v1265 = vpack.c.b16 %v1023, %v1021
        %v1266 = vpack.c.b16 %v1024, %v1022
        %v1267 = vpack.c.b16 %v1027, %v1025
        %v1268 = vpack.c.b16 %v1028, %v1026
        %v1269 = vpack.c.b16 %v1031, %v1029
        %v1270 = vpack.c.b16 %v1032, %v1030
        %v1271 = vpack.c.b16 %v1035, %v1033
        %v1272 = vpack.c.b16 %v1036, %v1034
        %v1273 = vpack.c.b16 %v1039, %v1037
        %v1274 = vpack.c.b16 %v1040, %v1038
        %v1275 = vpack.c.b16 %v1043, %v1041
        %v1276 = vpack.c.b16 %v1044, %v1042
        %v1277 = vpack.c.b16 %v1047, %v1045
        %v1278 = vpack.c.b16 %v1048, %v1046
        %v1279 = vpack.c.b16 %v1051, %v1049
        %v1280 = vpack.c.b16 %v1052, %v1050
        %v1281 = vpack.c.b16 %v1055, %v1053
        %v1282 = vpack.c.b16 %v1056, %v1054
        %v1283 = vpack.c.b16 %v1059, %v1057
        %v1284 = vpack.c.b16 %v1060, %v1058
        %v1285 = vpack.c.b16 %v1063, %v1061
        %v1286 = vpack.c.b16 %v1064, %v1062
        %v1287 = vpack.c.b16 %v1067, %v1065
        %v1288 = vpack.c.b16 %v1068, %v1066
        %v1289 = vpack.c.b16 %v1071, %v1069
        %v1290 = vpack.c.b16 %v1072, %v1070
        %v1291 = vpack.c.b16 %v1075, %v1073
        %v1292 = vpack.c.b16 %v1076, %v1074
        %v1293 = vpack.c.b16 %v1079, %v1077
        %v1294 = vpack.c.b16 %v1080, %v1078
        %v1295 = vpack.c.b16 %v1083, %v1081
        %v1296 = vpack.c.b16 %v1084, %v1082
        %v1297 = vpack.c.b16 %v1087, %v1085
        %v1298 = vpack.c.b16 %v1088, %v1086
        %v1299 = vpack.c.b16 %v1091, %v1089
        %v1300 = vpack.c.b16 %v1092, %v1090
        %v1301 = vpack.c.b16 %v1095, %v1093
        %v1302 = vpack.c.b16 %v1096, %v1094
        %v1303 = vpack.c.b16 %v1099, %v1097
        %v1304 = vpack.c.b16 %v1100, %v1098
        %v1305 = vpack.c.b16 %v1103, %v1101
        %v1306 = vpack.c.b16 %v1104, %v1102
        %v1307 = vpack.c.b16 %v1107, %v1105
        %v1308 = vpack.c.b16 %v1108, %v1106
        %v1309 = vpack.c.b16 %v1111, %v1109
        %v1310 = vpack.c.b16 %v1112, %v1110
        %v1311 = vpack.c.b16 %v1115, %v1113
        %v1312 = vpack.c.b16 %v1116, %v1114
        %v1313 = vpack.c.b16 %v1119, %v1117
        %v1314 = vpack.c.b16 %v1120, %v1118
        %v1315 = vpack.c.b16 %v1123, %v1121
        %v1316 = vpack.c.b16 %v1124, %v1122
        %v1317 = vpack.c.b16 %v1127, %v1125
        %v1318 = vpack.c.b16 %v1128, %v1126
        %v1319 = vpack.c.b16 %v1131, %v1129
        %v1320 = vpack.c.b16 %v1132, %v1130
        %v1321 = vpack.c.b16 %v1135, %v1133
        %v1322 = vpack.c.b16 %v1136, %v1134
        %v1323 = vpack.c.b16 %v1139, %v1137
        %v1324 = vpack.c.b16 %v1140, %v1138
        %v1325 = vpack.c.b16 %v1143, %v1141
        %v1326 = vpack.c.b16 %v1144, %v1142
        %v1327 = vpack.c.b16 %v1147, %v1145
        %v1328 = vpack.c.b16 %v1148, %v1146
        %v1329 = vpack.c.b16 %v1151, %v1149
        %v1330 = vpack.c.b16 %v1152, %v1150
        %v1331 = vpack.c.b16 %v1155, %v1153
        %v1332 = vpack.c.b16 %v1156, %v1154
        %v1333 = vpack.c.b16 %v1159, %v1157
        %v1334 = vpack.c.b16 %v1160, %v1158
        %v1335 = vpack.c.b16 %v1163, %v1161
        %v1336 = vpack.c.b16 %v1164, %v1162
        %v1337 = vpack.c.b16 %v1167, %v1165
        %v1338 = vpack.c.b16 %v1168, %v1166
        %v1339 = vpack.c.b16 %v1171, %v1169
        %v1340 = vpack.c.b16 %v1172, %v1170
        %v1341 = vpack.c.b16 %v1175, %v1173
        %v1342 = vpack.c.b16 %v1176, %v1174
        %v1343 = vpack.c.b16 %v1179, %v1177
        %v1344 = vpack.c.b16 %v1180, %v1178
        %v1345 = vpack.c.b16 %v1183, %v1181
        %v1346 = vpack.c.b16 %v1184, %v1182
        %v1347 = vpack.c.b16 %v1187, %v1185
        %v1348 = vpack.c.b16 %v1188, %v1186
        %v1349 = vpack.c.b16 %v1191, %v1189
        %v1350 = vpack.c.b16 %v1192, %v1190
        %v1351 = vpack.c.b16 %v1195, %v1193
        %v1352 = vpack.c.b16 %v1196, %v1194
        %v1353 = vpack.c.b16 %v1199, %v1197
        %v1354 = vpack.c.b16 %v1200, %v1198
        %v1355 = vpack.c.b16 %v1203, %v1201
        %v1356 = vpack.c.b16 %v1204, %v1202
        %v1357 = vpack.c.b16 %v1207, %v1205
        %v1358 = vpack.c.b16 %v1208, %v1206
        %v1359 = vpack.c.b16 %v1211, %v1209
        %v1360 = vpack.c.b16 %v1212, %v1210
        %v1361 = vpack.c.b16 %v1215, %v1213
        %v1362 = vpack.c.b16 %v1216, %v1214
        %v1363 = vpack.c.b16 %v1219, %v1217
        %v1364 = vpack.c.b16 %v1220, %v1218
        %v1365 = vpack.c.b16 %v1223, %v1221
        %v1366 = vpack.c.b16 %v1224, %v1222
        %v1367 = vpack.c.b16 %v1227, %v1225
        %v1368 = vpack.c.b16 %v1228, %v1226
        %v1369 = vpack.c.b16 %v1231, %v1229
        %v1370 = vpack.c.b16 %v1232, %v1230
        %v1371 = vpack.c.b16 %v1235, %v1233
        %v1372 = vpack.c.b16 %v1236, %v1234
        %v1373 = vpack.c.b16 %v1239, %v1237
        %v1374 = vpack.c.b16 %v1240, %v1238
        %v1375 = vpack.c.b16 %v1243, %v1241
        %v1376 = vpack.c.b16 %v1244, %v1242
        %v1377 = vpack.c.b16 %v1247, %v1245
        %v1378 = vpack.c.b16 %v1248, %v1246
        %v1379 = vpack.c.b16 %v1251, %v1249
        %v1380 = vpack.c.b16 %v1252, %v1250
        %1509 = vmatprep.subr.bf16.mxu0 %v1268
        %1510 = vmatpush1.bf16.msra.mxu0 %v1267
        %1511 = vmatprep.subr.bf16.mxu0 %v1266
        %1512 = vmatpush1.bf16.msra.mxu0 %v1265
        %1513 = vmatprep.subr.bf16.mxu0 %v1264
        %1514 = vmatpush1.bf16.msra.mxu0 %v1263
        %1515 = vmatprep.subr.bf16.mxu0 %v1262
        %1516 = vmatpush1.bf16.msra.mxu0 %v1261
        %1517 = vmatprep.subr.bf16.mxu0 %v1260
        %1518 = vmatpush1.bf16.msra.mxu0 %v1259
        %1519 = vmatprep.subr.bf16.mxu0 %v1258
        %1520 = vmatpush1.bf16.msra.mxu0 %v1257
        %1521 = vmatprep.subr.bf16.mxu0 %v1256
        %1522 = vmatpush1.bf16.msra.mxu0 %v1255
        %1523 = vmatprep.subr.bf16.mxu0 %v1254
        %1524 = vmatpush1.bf16.msra.mxu0 %v1253
        %1525 = vmatprep.subr.bf16.mxu0 %v1284
        %1526 = vmatpush2.bf16.msra.mxu0 %v1283
        %1527 = vmatprep.subr.bf16.mxu0 %v1282
        %1528 = vmatpush2.bf16.msra.mxu0 %v1281
        %1529 = vmatprep.subr.bf16.mxu0 %v1280
        %1530 = vmatpush2.bf16.msra.mxu0 %v1279
        %1531 = vmatprep.subr.bf16.mxu0 %v1278
        %1532 = vmatpush2.bf16.msra.mxu0 %v1277
        %1533 = vmatprep.subr.bf16.mxu0 %v1276
        %1534 = vmatpush2.bf16.msra.mxu0 %v1275
        %1535 = vmatprep.subr.bf16.mxu0 %v1274
        %1536 = vmatpush2.bf16.msra.mxu0 %v1273
        %1537 = vmatprep.subr.bf16.mxu0 %v1272
        %1538 = vmatpush2.bf16.msra.mxu0 %v1271
        %1539 = vmatprep.subr.bf16.mxu0 %v1270
        %1540 = vmatpush2.bf16.msra.mxu0 %v1269
        %1541 = vmatprep.mubr.bf16.mxu0 %v742
        %1542 = vmatmul.mubr.bf16.gmra.mxu0 %v741
        %v1543 = vpop.f32.mrf.mxu0
        %v1544 = vadd.f32 %v542, %v1543
        %v1545 = vpop.f32.mrf.mxu0
        %v1546 = vadd.f32 %v546, %v1545
        %v1547 = vpop.f32.mrf.mxu0
        %v1548 = vadd.f32 %v542, %v1547
        %v1549 = vpop.f32.mrf.mxu0
        %v1550 = vadd.f32 %v546, %v1549
        %1551 = vmatprep.mubr.bf16.mxu0 %v750
        %1552 = vmatmul.mubr.bf16.gmra.mxu0 %v749
        %v1553 = vpop.f32.mrf.mxu0
        %v1554 = vadd.f32 %v542, %v1553
        %v1555 = vpop.f32.mrf.mxu0
        %v1556 = vadd.f32 %v546, %v1555
        %v1557 = vpop.f32.mrf.mxu0
        %v1558 = vadd.f32 %v542, %v1557
        %v1559 = vpop.f32.mrf.mxu0
        %v1560 = vadd.f32 %v546, %v1559
        %1561 = vmatprep.mubr.bf16.mxu0 %v758
        %1562 = vmatmul.mubr.bf16.gmra.mxu0 %v757
        %v1563 = vpop.f32.mrf.mxu0
        %v1564 = vadd.f32 %v542, %v1563
        %v1565 = vpop.f32.mrf.mxu0
        %v1566 = vadd.f32 %v546, %v1565
        %v1567 = vpop.f32.mrf.mxu0
        %v1568 = vadd.f32 %v542, %v1567
        %v1569 = vpop.f32.mrf.mxu0
        %v1570 = vadd.f32 %v546, %v1569
        %1571 = vmatprep.mubr.bf16.mxu0 %v766
        %1572 = vmatmul.mubr.bf16.gmra.mxu0 %v765
        %v1573 = vpop.f32.mrf.mxu0
        %v1574 = vadd.f32 %v542, %v1573
        %v1575 = vpop.f32.mrf.mxu0
        %v1576 = vadd.f32 %v546, %v1575
        %v1577 = vpop.f32.mrf.mxu0
        %v1578 = vadd.f32 %v542, %v1577
        %v1579 = vpop.f32.mrf.mxu0
        %v1580 = vadd.f32 %v546, %v1579
        %1581 = vmatprep.mubr.bf16.mxu0 %v774
        %1582 = vmatmul.mubr.bf16.gmra.mxu0 %v773
        %v1583 = vpop.f32.mrf.mxu0
        %v1584 = vadd.f32 %v542, %v1583
        %v1585 = vpop.f32.mrf.mxu0
        %v1586 = vadd.f32 %v546, %v1585
        %v1587 = vpop.f32.mrf.mxu0
        %v1588 = vadd.f32 %v542, %v1587
        %v1589 = vpop.f32.mrf.mxu0
        %v1590 = vadd.f32 %v546, %v1589
        %1591 = vmatprep.mubr.bf16.mxu0 %v782
        %1592 = vmatmul.mubr.bf16.gmra.mxu0 %v781
        %v1593 = vpop.f32.mrf.mxu0
        %v1594 = vadd.f32 %v542, %v1593
        %v1595 = vpop.f32.mrf.mxu0
        %v1596 = vadd.f32 %v546, %v1595
        %v1597 = vpop.f32.mrf.mxu0
        %v1598 = vadd.f32 %v542, %v1597
        %v1599 = vpop.f32.mrf.mxu0
        %v1600 = vadd.f32 %v546, %v1599
        %1601 = vmatprep.mubr.bf16.mxu0 %v790
        %1602 = vmatmul.mubr.bf16.gmra.mxu0 %v789
        %v1603 = vpop.f32.mrf.mxu0
        %v1604 = vadd.f32 %v542, %v1603
        %v1605 = vpop.f32.mrf.mxu0
        %v1606 = vadd.f32 %v546, %v1605
        %v1607 = vpop.f32.mrf.mxu0
        %v1608 = vadd.f32 %v542, %v1607
        %v1609 = vpop.f32.mrf.mxu0
        %v1610 = vadd.f32 %v546, %v1609
        %1611 = vmatprep.mubr.bf16.mxu0 %v798
        %1612 = vmatmul.mubr.bf16.gmra.mxu0 %v797
        %v1613 = vpop.f32.mrf.mxu0
        %v1614 = vadd.f32 %v542, %v1613
        %v1615 = vpop.f32.mrf.mxu0
        %v1616 = vadd.f32 %v546, %v1615
        %v1617 = vpop.f32.mrf.mxu0
        %v1618 = vadd.f32 %v542, %v1617
        %v1619 = vpop.f32.mrf.mxu0
        %v1620 = vadd.f32 %v546, %v1619
        %1621 = vdwg.mxu0
        %1622 = vmatprep.subr.bf16.mxu0 %v1300
        %1623 = vmatpush1.bf16.msra.mxu0 %v1299
        %1624 = vmatprep.subr.bf16.mxu0 %v1298
        %1625 = vmatpush1.bf16.msra.mxu0 %v1297
        %1626 = vmatprep.subr.bf16.mxu0 %v1296
        %1627 = vmatpush1.bf16.msra.mxu0 %v1295
        %1628 = vmatprep.subr.bf16.mxu0 %v1294
        %1629 = vmatpush1.bf16.msra.mxu0 %v1293
        %1630 = vmatprep.subr.bf16.mxu0 %v1292
        %1631 = vmatpush1.bf16.msra.mxu0 %v1291
        %1632 = vmatprep.subr.bf16.mxu0 %v1290
        %1633 = vmatpush1.bf16.msra.mxu0 %v1289
        %1634 = vmatprep.subr.bf16.mxu0 %v1288
        %1635 = vmatpush1.bf16.msra.mxu0 %v1287
        %1636 = vmatprep.subr.bf16.mxu0 %v1286
        %1637 = vmatpush1.bf16.msra.mxu0 %v1285
        %1638 = vmatprep.subr.bf16.mxu0 %v1316
        %1639 = vmatpush2.bf16.msra.mxu0 %v1315
        %1640 = vmatprep.subr.bf16.mxu0 %v1314
        %1641 = vmatpush2.bf16.msra.mxu0 %v1313
        %1642 = vmatprep.subr.bf16.mxu0 %v1312
        %1643 = vmatpush2.bf16.msra.mxu0 %v1311
        %1644 = vmatprep.subr.bf16.mxu0 %v1310
        %1645 = vmatpush2.bf16.msra.mxu0 %v1309
        %1646 = vmatprep.subr.bf16.mxu0 %v1308
        %1647 = vmatpush2.bf16.msra.mxu0 %v1307
        %1648 = vmatprep.subr.bf16.mxu0 %v1306
        %1649 = vmatpush2.bf16.msra.mxu0 %v1305
        %1650 = vmatprep.subr.bf16.mxu0 %v1304
        %1651 = vmatpush2.bf16.msra.mxu0 %v1303
        %1652 = vmatprep.subr.bf16.mxu0 %v1302
        %1653 = vmatpush2.bf16.msra.mxu0 %v1301
        %1654 = vmatprep.mubr.bf16.mxu0 %v744
        %1655 = vmatmul.mubr.bf16.gmra.mxu0 %v743
        %v1656 = vpop.f32.mrf.mxu0
        %v1657 = vadd.f32 %v1544, %v1656
        %v1658 = vpop.f32.mrf.mxu0
        %v1659 = vadd.f32 %v1546, %v1658
        %v1660 = vpop.f32.mrf.mxu0
        %v1661 = vadd.f32 %v1548, %v1660
        %v1662 = vpop.f32.mrf.mxu0
        %v1663 = vadd.f32 %v1550, %v1662
        %1664 = vmatprep.mubr.bf16.mxu0 %v752
        %1665 = vmatmul.mubr.bf16.gmra.mxu0 %v751
        %v1666 = vpop.f32.mrf.mxu0
        %v1667 = vadd.f32 %v1554, %v1666
        %v1668 = vpop.f32.mrf.mxu0
        %v1669 = vadd.f32 %v1556, %v1668
        %v1670 = vpop.f32.mrf.mxu0
        %v1671 = vadd.f32 %v1558, %v1670
        %v1672 = vpop.f32.mrf.mxu0
        %v1673 = vadd.f32 %v1560, %v1672
        %1674 = vmatprep.mubr.bf16.mxu0 %v760
        %1675 = vmatmul.mubr.bf16.gmra.mxu0 %v759
        %v1676 = vpop.f32.mrf.mxu0
        %v1677 = vadd.f32 %v1564, %v1676
        %v1678 = vpop.f32.mrf.mxu0
        %v1679 = vadd.f32 %v1566, %v1678
        %v1680 = vpop.f32.mrf.mxu0
        %v1681 = vadd.f32 %v1568, %v1680
        %v1682 = vpop.f32.mrf.mxu0
        %v1683 = vadd.f32 %v1570, %v1682
        %1684 = vmatprep.mubr.bf16.mxu0 %v768
        %1685 = vmatmul.mubr.bf16.gmra.mxu0 %v767
        %v1686 = vpop.f32.mrf.mxu0
        %v1687 = vadd.f32 %v1574, %v1686
        %v1688 = vpop.f32.mrf.mxu0
        %v1689 = vadd.f32 %v1576, %v1688
        %v1690 = vpop.f32.mrf.mxu0
        %v1691 = vadd.f32 %v1578, %v1690
        %v1692 = vpop.f32.mrf.mxu0
        %v1693 = vadd.f32 %v1580, %v1692
        %1694 = vmatprep.mubr.bf16.mxu0 %v776
        %1695 = vmatmul.mubr.bf16.gmra.mxu0 %v775
        %v1696 = vpop.f32.mrf.mxu0
        %v1697 = vadd.f32 %v1584, %v1696
        %v1698 = vpop.f32.mrf.mxu0
        %v1699 = vadd.f32 %v1586, %v1698
        %v1700 = vpop.f32.mrf.mxu0
        %v1701 = vadd.f32 %v1588, %v1700
        %v1702 = vpop.f32.mrf.mxu0
        %v1703 = vadd.f32 %v1590, %v1702
        %1704 = vmatprep.mubr.bf16.mxu0 %v784
        %1705 = vmatmul.mubr.bf16.gmra.mxu0 %v783
        %v1706 = vpop.f32.mrf.mxu0
        %v1707 = vadd.f32 %v1594, %v1706
        %v1708 = vpop.f32.mrf.mxu0
        %v1709 = vadd.f32 %v1596, %v1708
        %v1710 = vpop.f32.mrf.mxu0
        %v1711 = vadd.f32 %v1598, %v1710
        %v1712 = vpop.f32.mrf.mxu0
        %v1713 = vadd.f32 %v1600, %v1712
        %1714 = vmatprep.mubr.bf16.mxu0 %v792
        %1715 = vmatmul.mubr.bf16.gmra.mxu0 %v791
        %v1716 = vpop.f32.mrf.mxu0
        %v1717 = vadd.f32 %v1604, %v1716
        %v1718 = vpop.f32.mrf.mxu0
        %v1719 = vadd.f32 %v1606, %v1718
        %v1720 = vpop.f32.mrf.mxu0
        %v1721 = vadd.f32 %v1608, %v1720
        %v1722 = vpop.f32.mrf.mxu0
        %v1723 = vadd.f32 %v1610, %v1722
        %1724 = vmatprep.mubr.bf16.mxu0 %v800
        %1725 = vmatmul.mubr.bf16.gmra.mxu0 %v799
        %v1726 = vpop.f32.mrf.mxu0
        %v1727 = vadd.f32 %v1614, %v1726
        %v1728 = vpop.f32.mrf.mxu0
        %v1729 = vadd.f32 %v1616, %v1728
        %v1730 = vpop.f32.mrf.mxu0
        %v1731 = vadd.f32 %v1618, %v1730
        %v1732 = vpop.f32.mrf.mxu0
        %v1733 = vadd.f32 %v1620, %v1732
        %1734 = vdwg.mxu0
        %1735 = vmatprep.subr.bf16.mxu0 %v1332
        %1736 = vmatpush1.bf16.msra.mxu0 %v1331
        %1737 = vmatprep.subr.bf16.mxu0 %v1330
        %1738 = vmatpush1.bf16.msra.mxu0 %v1329
        %1739 = vmatprep.subr.bf16.mxu0 %v1328
        %1740 = vmatpush1.bf16.msra.mxu0 %v1327
        %1741 = vmatprep.subr.bf16.mxu0 %v1326
        %1742 = vmatpush1.bf16.msra.mxu0 %v1325
        %1743 = vmatprep.subr.bf16.mxu0 %v1324
        %1744 = vmatpush1.bf16.msra.mxu0 %v1323
        %1745 = vmatprep.subr.bf16.mxu0 %v1322
        %1746 = vmatpush1.bf16.msra.mxu0 %v1321
        %1747 = vmatprep.subr.bf16.mxu0 %v1320
        %1748 = vmatpush1.bf16.msra.mxu0 %v1319
        %1749 = vmatprep.subr.bf16.mxu0 %v1318
        %1750 = vmatpush1.bf16.msra.mxu0 %v1317
        %1751 = vmatprep.subr.bf16.mxu0 %v1348
        %1752 = vmatpush2.bf16.msra.mxu0 %v1347
        %1753 = vmatprep.subr.bf16.mxu0 %v1346
        %1754 = vmatpush2.bf16.msra.mxu0 %v1345
        %1755 = vmatprep.subr.bf16.mxu0 %v1344
        %1756 = vmatpush2.bf16.msra.mxu0 %v1343
        %1757 = vmatprep.subr.bf16.mxu0 %v1342
        %1758 = vmatpush2.bf16.msra.mxu0 %v1341
        %1759 = vmatprep.subr.bf16.mxu0 %v1340
        %1760 = vmatpush2.bf16.msra.mxu0 %v1339
        %1761 = vmatprep.subr.bf16.mxu0 %v1338
        %1762 = vmatpush2.bf16.msra.mxu0 %v1337
        %1763 = vmatprep.subr.bf16.mxu0 %v1336
        %1764 = vmatpush2.bf16.msra.mxu0 %v1335
        %1765 = vmatprep.subr.bf16.mxu0 %v1334
        %1766 = vmatpush2.bf16.msra.mxu0 %v1333
        %1767 = vmatprep.mubr.bf16.mxu0 %v746
        %1768 = vmatmul.mubr.bf16.gmra.mxu0 %v745
        %v1769 = vpop.f32.mrf.mxu0
        %v1770 = vadd.f32 %v1657, %v1769
        %v1771 = vpop.f32.mrf.mxu0
        %v1772 = vadd.f32 %v1659, %v1771
        %v1773 = vpop.f32.mrf.mxu0
        %v1774 = vadd.f32 %v1661, %v1773
        %v1775 = vpop.f32.mrf.mxu0
        %v1776 = vadd.f32 %v1663, %v1775
        %1777 = vmatprep.mubr.bf16.mxu0 %v754
        %1778 = vmatmul.mubr.bf16.gmra.mxu0 %v753
        %v1779 = vpop.f32.mrf.mxu0
        %v1780 = vadd.f32 %v1667, %v1779
        %v1781 = vpop.f32.mrf.mxu0
        %v1782 = vadd.f32 %v1669, %v1781
        %v1783 = vpop.f32.mrf.mxu0
        %v1784 = vadd.f32 %v1671, %v1783
        %v1785 = vpop.f32.mrf.mxu0
        %v1786 = vadd.f32 %v1673, %v1785
        %1787 = vmatprep.mubr.bf16.mxu0 %v762
        %1788 = vmatmul.mubr.bf16.gmra.mxu0 %v761
        %v1789 = vpop.f32.mrf.mxu0
        %v1790 = vadd.f32 %v1677, %v1789
        %v1791 = vpop.f32.mrf.mxu0
        %v1792 = vadd.f32 %v1679, %v1791
        %v1793 = vpop.f32.mrf.mxu0
        %v1794 = vadd.f32 %v1681, %v1793
        %v1795 = vpop.f32.mrf.mxu0
        %v1796 = vadd.f32 %v1683, %v1795
        %1797 = vmatprep.mubr.bf16.mxu0 %v770
        %1798 = vmatmul.mubr.bf16.gmra.mxu0 %v769
        %v1799 = vpop.f32.mrf.mxu0
        %v1800 = vadd.f32 %v1687, %v1799
        %v1801 = vpop.f32.mrf.mxu0
        %v1802 = vadd.f32 %v1689, %v1801
        %v1803 = vpop.f32.mrf.mxu0
        %v1804 = vadd.f32 %v1691, %v1803
        %v1805 = vpop.f32.mrf.mxu0
        %v1806 = vadd.f32 %v1693, %v1805
        %1807 = vmatprep.mubr.bf16.mxu0 %v778
        %1808 = vmatmul.mubr.bf16.gmra.mxu0 %v777
        %v1809 = vpop.f32.mrf.mxu0
        %v1810 = vadd.f32 %v1697, %v1809
        %v1811 = vpop.f32.mrf.mxu0
        %v1812 = vadd.f32 %v1699, %v1811
        %v1813 = vpop.f32.mrf.mxu0
        %v1814 = vadd.f32 %v1701, %v1813
        %v1815 = vpop.f32.mrf.mxu0
        %v1816 = vadd.f32 %v1703, %v1815
        %1817 = vmatprep.mubr.bf16.mxu0 %v786
        %1818 = vmatmul.mubr.bf16.gmra.mxu0 %v785
        %v1819 = vpop.f32.mrf.mxu0
        %v1820 = vadd.f32 %v1707, %v1819
        %v1821 = vpop.f32.mrf.mxu0
        %v1822 = vadd.f32 %v1709, %v1821
        %v1823 = vpop.f32.mrf.mxu0
        %v1824 = vadd.f32 %v1711, %v1823
        %v1825 = vpop.f32.mrf.mxu0
        %v1826 = vadd.f32 %v1713, %v1825
        %1827 = vmatprep.mubr.bf16.mxu0 %v794
        %1828 = vmatmul.mubr.bf16.gmra.mxu0 %v793
        %v1829 = vpop.f32.mrf.mxu0
        %v1830 = vadd.f32 %v1717, %v1829
        %v1831 = vpop.f32.mrf.mxu0
        %v1832 = vadd.f32 %v1719, %v1831
        %v1833 = vpop.f32.mrf.mxu0
        %v1834 = vadd.f32 %v1721, %v1833
        %v1835 = vpop.f32.mrf.mxu0
        %v1836 = vadd.f32 %v1723, %v1835
        %1837 = vmatprep.mubr.bf16.mxu0 %v802
        %1838 = vmatmul.mubr.bf16.gmra.mxu0 %v801
        %v1839 = vpop.f32.mrf.mxu0
        %v1840 = vadd.f32 %v1727, %v1839
        %v1841 = vpop.f32.mrf.mxu0
        %v1842 = vadd.f32 %v1729, %v1841
        %v1843 = vpop.f32.mrf.mxu0
        %v1844 = vadd.f32 %v1731, %v1843
        %v1845 = vpop.f32.mrf.mxu0
        %v1846 = vadd.f32 %v1733, %v1845
        %1847 = vdwg.mxu0
        %1848 = vmatprep.subr.bf16.mxu0 %v1364
        %1849 = vmatpush1.bf16.msra.mxu0 %v1363
        %1850 = vmatprep.subr.bf16.mxu0 %v1362
        %1851 = vmatpush1.bf16.msra.mxu0 %v1361
        %1852 = vmatprep.subr.bf16.mxu0 %v1360
        %1853 = vmatpush1.bf16.msra.mxu0 %v1359
        %1854 = vmatprep.subr.bf16.mxu0 %v1358
        %1855 = vmatpush1.bf16.msra.mxu0 %v1357
        %1856 = vmatprep.subr.bf16.mxu0 %v1356
        %1857 = vmatpush1.bf16.msra.mxu0 %v1355
        %1858 = vmatprep.subr.bf16.mxu0 %v1354
        %1859 = vmatpush1.bf16.msra.mxu0 %v1353
        %1860 = vmatprep.subr.bf16.mxu0 %v1352
        %1861 = vmatpush1.bf16.msra.mxu0 %v1351
        %1862 = vmatprep.subr.bf16.mxu0 %v1350
        %1863 = vmatpush1.bf16.msra.mxu0 %v1349
        %1864 = vmatprep.subr.bf16.mxu0 %v1380
        %1865 = vmatpush2.bf16.msra.mxu0 %v1379
        %1866 = vmatprep.subr.bf16.mxu0 %v1378
        %1867 = vmatpush2.bf16.msra.mxu0 %v1377
        %1868 = vmatprep.subr.bf16.mxu0 %v1376
        %1869 = vmatpush2.bf16.msra.mxu0 %v1375
        %1870 = vmatprep.subr.bf16.mxu0 %v1374
        %1871 = vmatpush2.bf16.msra.mxu0 %v1373
        %1872 = vmatprep.subr.bf16.mxu0 %v1372
        %1873 = vmatpush2.bf16.msra.mxu0 %v1371
        %1874 = vmatprep.subr.bf16.mxu0 %v1370
        %1875 = vmatpush2.bf16.msra.mxu0 %v1369
        %1876 = vmatprep.subr.bf16.mxu0 %v1368
        %1877 = vmatpush2.bf16.msra.mxu0 %v1367
        %1878 = vmatprep.subr.bf16.mxu0 %v1366
        %1879 = vmatpush2.bf16.msra.mxu0 %v1365
        %1880 = vmatprep.mubr.bf16.mxu0 %v748
        %1881 = vmatmul.mubr.bf16.gmra.mxu0 %v747
        %v1882 = vpop.f32.mrf.mxu0
        %v1883 = vadd.f32 %v1770, %v1882
        %v1884 = vpop.f32.mrf.mxu0
        %v1885 = vadd.f32 %v1772, %v1884
        %v1886 = vpop.f32.mrf.mxu0
        %v1887 = vadd.f32 %v1774, %v1886
        %v1888 = vpop.f32.mrf.mxu0
        %v1889 = vadd.f32 %v1776, %v1888
        %1890 = vmatprep.mubr.bf16.mxu0 %v756
        %1891 = vmatmul.mubr.bf16.gmra.mxu0 %v755
        %v1892 = vpop.f32.mrf.mxu0
        %v1893 = vadd.f32 %v1780, %v1892
        %v1894 = vpop.f32.mrf.mxu0
        %v1895 = vadd.f32 %v1782, %v1894
        %v1896 = vpop.f32.mrf.mxu0
        %v1897 = vadd.f32 %v1784, %v1896
        %v1898 = vpop.f32.mrf.mxu0
        %v1899 = vadd.f32 %v1786, %v1898
        %1900 = vmatprep.mubr.bf16.mxu0 %v764
        %1901 = vmatmul.mubr.bf16.gmra.mxu0 %v763
        %v1902 = vpop.f32.mrf.mxu0
        %v1903 = vadd.f32 %v1790, %v1902
        %v1904 = vpop.f32.mrf.mxu0
        %v1905 = vadd.f32 %v1792, %v1904
        %v1906 = vpop.f32.mrf.mxu0
        %v1907 = vadd.f32 %v1794, %v1906
        %v1908 = vpop.f32.mrf.mxu0
        %v1909 = vadd.f32 %v1796, %v1908
        %1910 = vmatprep.mubr.bf16.mxu0 %v772
        %1911 = vmatmul.mubr.bf16.gmra.mxu0 %v771
        %v1912 = vpop.f32.mrf.mxu0
        %v1913 = vadd.f32 %v1800, %v1912
        %v1914 = vpop.f32.mrf.mxu0
        %v1915 = vadd.f32 %v1802, %v1914
        %v1916 = vpop.f32.mrf.mxu0
        %v1917 = vadd.f32 %v1804, %v1916
        %v1918 = vpop.f32.mrf.mxu0
        %v1919 = vadd.f32 %v1806, %v1918
        %1920 = vmatprep.mubr.bf16.mxu0 %v780
        %1921 = vmatmul.mubr.bf16.gmra.mxu0 %v779
        %v1922 = vpop.f32.mrf.mxu0
        %v1923 = vadd.f32 %v1810, %v1922
        %v1924 = vpop.f32.mrf.mxu0
        %v1925 = vadd.f32 %v1812, %v1924
        %v1926 = vpop.f32.mrf.mxu0
        %v1927 = vadd.f32 %v1814, %v1926
        %v1928 = vpop.f32.mrf.mxu0
        %v1929 = vadd.f32 %v1816, %v1928
        %1930 = vmatprep.mubr.bf16.mxu0 %v788
        %1931 = vmatmul.mubr.bf16.gmra.mxu0 %v787
        %v1932 = vpop.f32.mrf.mxu0
        %v1933 = vadd.f32 %v1820, %v1932
        %v1934 = vpop.f32.mrf.mxu0
        %v1935 = vadd.f32 %v1822, %v1934
        %v1936 = vpop.f32.mrf.mxu0
        %v1937 = vadd.f32 %v1824, %v1936
        %v1938 = vpop.f32.mrf.mxu0
        %v1939 = vadd.f32 %v1826, %v1938
        %1940 = vmatprep.mubr.bf16.mxu0 %v796
        %1941 = vmatmul.mubr.bf16.gmra.mxu0 %v795
        %v1942 = vpop.f32.mrf.mxu0
        %v1943 = vadd.f32 %v1830, %v1942
        %v1944 = vpop.f32.mrf.mxu0
        %v1945 = vadd.f32 %v1832, %v1944
        %v1946 = vpop.f32.mrf.mxu0
        %v1947 = vadd.f32 %v1834, %v1946
        %v1948 = vpop.f32.mrf.mxu0
        %v1949 = vadd.f32 %v1836, %v1948
        %1950 = vmatprep.mubr.bf16.mxu0 %v804
        %1951 = vmatmul.mubr.bf16.gmra.mxu0 %v803
        %v1952 = vpop.f32.mrf.mxu0
        %v1953 = vadd.f32 %v1840, %v1952
        %v1954 = vpop.f32.mrf.mxu0
        %v1955 = vadd.f32 %v1842, %v1954
        %v1956 = vpop.f32.mrf.mxu0
        %v1957 = vadd.f32 %v1844, %v1956
        %v1958 = vpop.f32.mrf.mxu0
        %v1959 = vadd.f32 %v1846, %v1958
        %1960 = vdwg.mxu0
        %v1961 = vmax.f32 %v1883, 0.0
        %v1962 = vmax.f32 %v1885, 0.0
        %v1963 = vmax.f32 %v1887, 0.0
        %v1964 = vmax.f32 %v1889, 0.0
        %v1965 = vmax.f32 %v1893, 0.0
        %v1966 = vmax.f32 %v1895, 0.0
        %v1967 = vmax.f32 %v1897, 0.0
        %v1968 = vmax.f32 %v1899, 0.0
        %v1969 = vmax.f32 %v1903, 0.0
        %v1970 = vmax.f32 %v1905, 0.0
        %v1971 = vmax.f32 %v1907, 0.0
        %v1972 = vmax.f32 %v1909, 0.0
        %v1973 = vmax.f32 %v1913, 0.0
        %v1974 = vmax.f32 %v1915, 0.0
        %v1975 = vmax.f32 %v1917, 0.0
        %v1976 = vmax.f32 %v1919, 0.0
        %v1977 = vmax.f32 %v1923, 0.0
        %v1978 = vmax.f32 %v1925, 0.0
        %v1979 = vmax.f32 %v1927, 0.0
        %v1980 = vmax.f32 %v1929, 0.0
        %v1981 = vmax.f32 %v1933, 0.0
        %v1982 = vmax.f32 %v1935, 0.0
        %v1983 = vmax.f32 %v1937, 0.0
        %v1984 = vmax.f32 %v1939, 0.0
        %v1985 = vmax.f32 %v1943, 0.0
        %v1986 = vmax.f32 %v1945, 0.0
        %v1987 = vmax.f32 %v1947, 0.0
        %v1988 = vmax.f32 %v1949, 0.0
        %v1989 = vmax.f32 %v1953, 0.0
        %v1990 = vmax.f32 %v1955, 0.0
        %v1991 = vmax.f32 %v1957, 0.0
        %v1992 = vmax.f32 %v1959, 0.0
        %v1993 = vpack.c.bf16 %v1963, %v1961
        %v1994 = vpack.c.bf16 %v1964, %v1962
        %v1995 = vpack.c.bf16 %v1967, %v1965
        %v1996 = vpack.c.bf16 %v1968, %v1966
        %v1997 = vpack.c.bf16 %v1971, %v1969
        %v1998 = vpack.c.bf16 %v1972, %v1970
        %v1999 = vpack.c.bf16 %v1975, %v1973
        %v2000 = vpack.c.bf16 %v1976, %v1974
        %v2001 = vpack.c.bf16 %v1979, %v1977
        %v2002 = vpack.c.bf16 %v1980, %v1978
        %v2003 = vpack.c.bf16 %v1983, %v1981
        %v2004 = vpack.c.bf16 %v1984, %v1982
        %v2005 = vpack.c.bf16 %v1987, %v1985
        %v2006 = vpack.c.bf16 %v1988, %v1986
        %v2007 = vpack.c.bf16 %v1991, %v1989
        %v2008 = vpack.c.bf16 %v1992, %v1990
        %v2009 = vld [vmem:[#allocation7] sm:$0xf]
        %v2010 = vld [vmem:[#allocation7 + $0x4] sm:$0xf]
        %v2011 = vld [vmem:[#allocation7 + $0x8] sm:$0xf]
        %v2012 = vld [vmem:[#allocation7 + $0xc] sm:$0xf]
        %v2013 = vld [vmem:[#allocation7 + $0x10] sm:$0xf]
        %v2014 = vld [vmem:[#allocation7 + $0x14] sm:$0xf]
        %v2015 = vld [vmem:[#allocation7 + $0x18] sm:$0xf]
        %v2016 = vld [vmem:[#allocation7 + $0x1c] sm:$0xf]
        %v2017 = vld [vmem:[#allocation7 + $0x20] sm:$0xf]
        %v2018 = vld [vmem:[#allocation7 + $0x24] sm:$0xf]
        %v2019 = vld [vmem:[#allocation7 + $0x28] sm:$0xf]
        %v2020 = vld [vmem:[#allocation7 + $0x2c] sm:$0xf]
        %v2021 = vld [vmem:[#allocation7 + $0x30] sm:$0xf]
        %v2022 = vld [vmem:[#allocation7 + $0x34] sm:$0xf]
        %v2023 = vld [vmem:[#allocation7 + $0x38] sm:$0xf]
        %v2024 = vld [vmem:[#allocation7 + $0x3c] sm:$0xf]
        %v2025 = vld [vmem:[#allocation7 + $0x40] sm:$0xf]
        %v2026 = vld [vmem:[#allocation7 + $0x44] sm:$0xf]
        %v2027 = vld [vmem:[#allocation7 + $0x48] sm:$0xf]
        %v2028 = vld [vmem:[#allocation7 + $0x4c] sm:$0xf]
        %v2029 = vld [vmem:[#allocation7 + $0x50] sm:$0xf]
        %v2030 = vld [vmem:[#allocation7 + $0x54] sm:$0xf]
        %v2031 = vld [vmem:[#allocation7 + $0x58] sm:$0xf]
        %v2032 = vld [vmem:[#allocation7 + $0x5c] sm:$0xf]
        %v2033 = vld [vmem:[#allocation7 + $0x60] sm:$0xf]
        %v2034 = vld [vmem:[#allocation7 + $0x64] sm:$0xf]
        %v2035 = vld [vmem:[#allocation7 + $0x68] sm:$0xf]
        %v2036 = vld [vmem:[#allocation7 + $0x6c] sm:$0xf]
        %v2037 = vld [vmem:[#allocation7 + $0x70] sm:$0xf]
        %v2038 = vld [vmem:[#allocation7 + $0x74] sm:$0xf]
        %v2039 = vld [vmem:[#allocation7 + $0x78] sm:$0xf]
        %v2040 = vld [vmem:[#allocation7 + $0x7c] sm:$0xf]
        %v2041 = vld [vmem:[%s4] sm:$0x1]
        %v2043 = vlaneseq
        %v2044 = vshrl.u32 %v2043, 7
        %v2045 = vsub.s32 0, %v2044
        %v2046 = vrot.slane %v2041, %v2045
        %v2080 = vunpack.c.l.b16 %v2009
        %v2081 = vunpack.c.l.b16 %v2010
        %v2082 = vunpack.c.l.b16 %v2011
        %v2083 = vunpack.c.l.b16 %v2012
        %v2084 = vunpack.c.l.b16 %v2013
        %v2085 = vunpack.c.l.b16 %v2014
        %v2086 = vunpack.c.l.b16 %v2015
        %v2087 = vunpack.c.l.b16 %v2016
        %v2088 = vunpack.c.l.b16 %v2017
        %v2089 = vunpack.c.l.b16 %v2018
        %v2090 = vunpack.c.l.b16 %v2019
        %v2091 = vunpack.c.l.b16 %v2020
        %v2092 = vunpack.c.l.b16 %v2021
        %v2093 = vunpack.c.l.b16 %v2022
        %v2094 = vunpack.c.l.b16 %v2023
        %v2095 = vunpack.c.l.b16 %v2024
        %v2096 = vunpack.c.l.b16 %v2025
        %v2097 = vunpack.c.l.b16 %v2026
        %v2098 = vunpack.c.l.b16 %v2027
        %v2099 = vunpack.c.l.b16 %v2028
        %v2100 = vunpack.c.l.b16 %v2029
        %v2101 = vunpack.c.l.b16 %v2030
        %v2102 = vunpack.c.l.b16 %v2031
        %v2103 = vunpack.c.l.b16 %v2032
        %v2104 = vunpack.c.l.b16 %v2033
        %v2105 = vunpack.c.l.b16 %v2034
        %v2106 = vunpack.c.l.b16 %v2035
        %v2107 = vunpack.c.l.b16 %v2036
        %v2108 = vunpack.c.l.b16 %v2037
        %v2109 = vunpack.c.l.b16 %v2038
        %v2110 = vunpack.c.l.b16 %v2039
        %v2111 = vunpack.c.l.b16 %v2040
        %v2112 = vpack.c.b16 %v2081, %v2080
        %v2113 = vpack.c.b16 %v2083, %v2082
        %v2114 = vpack.c.b16 %v2085, %v2084
        %v2115 = vpack.c.b16 %v2087, %v2086
        %v2116 = vpack.c.b16 %v2089, %v2088
        %v2117 = vpack.c.b16 %v2091, %v2090
        %v2118 = vpack.c.b16 %v2093, %v2092
        %v2119 = vpack.c.b16 %v2095, %v2094
        %v2120 = vpack.c.b16 %v2097, %v2096
        %v2121 = vpack.c.b16 %v2099, %v2098
        %v2122 = vpack.c.b16 %v2101, %v2100
        %v2123 = vpack.c.b16 %v2103, %v2102
        %v2124 = vpack.c.b16 %v2105, %v2104
        %v2125 = vpack.c.b16 %v2107, %v2106
        %v2126 = vpack.c.b16 %v2109, %v2108
        %v2127 = vpack.c.b16 %v2111, %v2110
        %2144 = vmatprep.subr.bf16.mxu0 0
        %2145 = vmatpush1.bf16.msra.mxu0 %v2119
        %2146 = vmatprep.subr.bf16.mxu0 0
        %2147 = vmatpush1.bf16.msra.mxu0 %v2118
        %2148 = vmatprep.subr.bf16.mxu0 0
        %2149 = vmatpush1.bf16.msra.mxu0 %v2117
        %2150 = vmatprep.subr.bf16.mxu0 0
        %2151 = vmatpush1.bf16.msra.mxu0 %v2116
        %2152 = vmatprep.subr.bf16.mxu0 0
        %2153 = vmatpush1.bf16.msra.mxu0 %v2115
        %2154 = vmatprep.subr.bf16.mxu0 0
        %2155 = vmatpush1.bf16.msra.mxu0 %v2114
        %2156 = vmatprep.subr.bf16.mxu0 0
        %2157 = vmatpush1.bf16.msra.mxu0 %v2113
        %2158 = vmatprep.subr.bf16.mxu0 0
        %2159 = vmatpush1.bf16.msra.mxu0 %v2112
        %2160 = vmatprep.subr.bf16.mxu0 0
        %2161 = vmatpush2.bf16.msra.mxu0 %v2127
        %2162 = vmatprep.subr.bf16.mxu0 0
        %2163 = vmatpush2.bf16.msra.mxu0 %v2126
        %2164 = vmatprep.subr.bf16.mxu0 0
        %2165 = vmatpush2.bf16.msra.mxu0 %v2125
        %2166 = vmatprep.subr.bf16.mxu0 0
        %2167 = vmatpush2.bf16.msra.mxu0 %v2124
        %2168 = vmatprep.subr.bf16.mxu0 0
        %2169 = vmatpush2.bf16.msra.mxu0 %v2123
        %2170 = vmatprep.subr.bf16.mxu0 0
        %2171 = vmatpush2.bf16.msra.mxu0 %v2122
        %2172 = vmatprep.subr.bf16.mxu0 0
        %2173 = vmatpush2.bf16.msra.mxu0 %v2121
        %2174 = vmatprep.subr.bf16.mxu0 0
        %2175 = vmatpush2.bf16.msra.mxu0 %v2120
        %2176 = vmatprep.mubr.bf16.mxu0 %v1994
        %2177 = vmatmul.mubr.bf16.gmra.mxu0 %v1993
        %v2178 = vpop.f32.mrf.mxu0
        %v2179 = vadd.f32 %v2046, %v2178
        %v2180 = vpop.f32.mrf.mxu0
        %v2181 = vpop.f32.mrf.mxu0
        %v2182 = vadd.f32 %v2046, %v2181
        %v2183 = vpop.f32.mrf.mxu0
        %2184 = vmatprep.mubr.bf16.mxu0 %v1996
        %2185 = vmatmul.mubr.bf16.gmra.mxu0 %v1995
        %v2186 = vpop.f32.mrf.mxu0
        %v2187 = vadd.f32 %v2046, %v2186
        %v2188 = vpop.f32.mrf.mxu0
        %v2189 = vpop.f32.mrf.mxu0
        %v2190 = vadd.f32 %v2046, %v2189
        %v2191 = vpop.f32.mrf.mxu0
        %2192 = vmatprep.mubr.bf16.mxu0 %v1998
        %2193 = vmatmul.mubr.bf16.gmra.mxu0 %v1997
        %v2194 = vpop.f32.mrf.mxu0
        %v2195 = vadd.f32 %v2046, %v2194
        %v2196 = vpop.f32.mrf.mxu0
        %v2197 = vpop.f32.mrf.mxu0
        %v2198 = vadd.f32 %v2046, %v2197
        %v2199 = vpop.f32.mrf.mxu0
        %2200 = vmatprep.mubr.bf16.mxu0 %v2000
        %2201 = vmatmul.mubr.bf16.gmra.mxu0 %v1999
        %v2202 = vpop.f32.mrf.mxu0
        %v2203 = vadd.f32 %v2046, %v2202
        %v2204 = vpop.f32.mrf.mxu0
        %v2205 = vpop.f32.mrf.mxu0
        %v2206 = vadd.f32 %v2046, %v2205
        %v2207 = vpop.f32.mrf.mxu0
        %2208 = vmatprep.mubr.bf16.mxu0 %v2002
        %2209 = vmatmul.mubr.bf16.gmra.mxu0 %v2001
        %v2210 = vpop.f32.mrf.mxu0
        %v2211 = vadd.f32 %v2046, %v2210
        %v2212 = vpop.f32.mrf.mxu0
        %v2213 = vpop.f32.mrf.mxu0
        %v2214 = vadd.f32 %v2046, %v2213
        %v2215 = vpop.f32.mrf.mxu0
        %2216 = vmatprep.mubr.bf16.mxu0 %v2004
        %2217 = vmatmul.mubr.bf16.gmra.mxu0 %v2003
        %v2218 = vpop.f32.mrf.mxu0
        %v2219 = vadd.f32 %v2046, %v2218
        %v2220 = vpop.f32.mrf.mxu0
        %v2221 = vpop.f32.mrf.mxu0
        %v2222 = vadd.f32 %v2046, %v2221
        %v2223 = vpop.f32.mrf.mxu0
        %2224 = vmatprep.mubr.bf16.mxu0 %v2006
        %2225 = vmatmul.mubr.bf16.gmra.mxu0 %v2005
        %v2226 = vpop.f32.mrf.mxu0
        %v2227 = vadd.f32 %v2046, %v2226
        %v2228 = vpop.f32.mrf.mxu0
        %v2229 = vpop.f32.mrf.mxu0
        %v2230 = vadd.f32 %v2046, %v2229
        %v2231 = vpop.f32.mrf.mxu0
        %2232 = vmatprep.mubr.bf16.mxu0 %v2008
        %2233 = vmatmul.mubr.bf16.gmra.mxu0 %v2007
        %v2234 = vpop.f32.mrf.mxu0
        %v2235 = vadd.f32 %v2046, %v2234
        %v2236 = vpop.f32.mrf.mxu0
        %v2237 = vpop.f32.mrf.mxu0
        %v2238 = vadd.f32 %v2046, %v2237
        %v2239 = vpop.f32.mrf.mxu0
        %2240 = vdwg.mxu0
        %v2241 = vmax.f32 %v2179, 0.0
        %v2242 = vmax.f32 %v2182, 0.0
        %v2243 = vmax.f32 %v2187, 0.0
        %v2244 = vmax.f32 %v2190, 0.0
        %v2245 = vmax.f32 %v2195, 0.0
        %v2246 = vmax.f32 %v2198, 0.0
        %v2247 = vmax.f32 %v2203, 0.0
        %v2248 = vmax.f32 %v2206, 0.0
        %v2249 = vmax.f32 %v2211, 0.0
        %v2250 = vmax.f32 %v2214, 0.0
        %v2251 = vmax.f32 %v2219, 0.0
        %v2252 = vmax.f32 %v2222, 0.0
        %v2253 = vmax.f32 %v2227, 0.0
        %v2254 = vmax.f32 %v2230, 0.0
        %v2255 = vmax.f32 %v2235, 0.0
        %v2256 = vmax.f32 %v2238, 0.0
        %v2257 = vpack.c.bf16 %v2242, %v2241
        %v2258 = vpack.c.bf16 %v2244, %v2243
        %v2259 = vpack.c.bf16 %v2246, %v2245
        %v2260 = vpack.c.bf16 %v2248, %v2247
        %v2261 = vpack.c.bf16 %v2250, %v2249
        %v2262 = vpack.c.bf16 %v2252, %v2251
        %v2263 = vpack.c.bf16 %v2254, %v2253
        %v2264 = vpack.c.bf16 %v2256, %v2255
        %v2265 = vld [vmem:[#allocation8] sm:$0xf]
        %v2266 = vld [vmem:[#allocation8 + $0x4] sm:$0xf]
        %v2267 = vld [vmem:[#allocation8 + $0x8] sm:$0xf]
        %v2268 = vld [vmem:[#allocation8 + $0xc] sm:$0xf]
        %v2269 = vld [vmem:[#allocation8 + $0x10] sm:$0xf]
        %v2270 = vld [vmem:[#allocation8 + $0x14] sm:$0xf]
        %v2271 = vld [vmem:[#allocation8 + $0x18] sm:$0xf]
        %v2272 = vld [vmem:[#allocation8 + $0x1c] sm:$0xf]
        %v2273 = vld [vmem:[#allocation8 + $0x20] sm:$0xf]
        %v2274 = vld [vmem:[#allocation8 + $0x24] sm:$0xf]
        %v2275 = vld [vmem:[#allocation8 + $0x28] sm:$0xf]
        %v2276 = vld [vmem:[#allocation8 + $0x2c] sm:$0xf]
        %v2277 = vld [vmem:[#allocation8 + $0x30] sm:$0xf]
        %v2278 = vld [vmem:[#allocation8 + $0x34] sm:$0xf]
        %v2279 = vld [vmem:[#allocation8 + $0x38] sm:$0xf]
        %v2280 = vld [vmem:[#allocation8 + $0x3c] sm:$0xf]
        %v2281 = vld [vmem:[%s6] sm:$0x1]
        %v2283 = vlaneseq
        %v2284 = vshrl.u32 %v2283, 7
        %v2285 = vsub.s32 0, %v2284
        %v2286 = vrot.slane %v2281, %v2285
        %v2304 = vunpack.c.l.b16 %v2265
        %v2305 = vunpack.c.l.b16 %v2266
        %v2306 = vunpack.c.l.b16 %v2267
        %v2307 = vunpack.c.l.b16 %v2268
        %v2308 = vunpack.c.l.b16 %v2269
        %v2309 = vunpack.c.l.b16 %v2270
        %v2310 = vunpack.c.l.b16 %v2271
        %v2311 = vunpack.c.l.b16 %v2272
        %v2312 = vunpack.c.l.b16 %v2273
        %v2313 = vunpack.c.l.b16 %v2274
        %v2314 = vunpack.c.l.b16 %v2275
        %v2315 = vunpack.c.l.b16 %v2276
        %v2316 = vunpack.c.l.b16 %v2277
        %v2317 = vunpack.c.l.b16 %v2278
        %v2318 = vunpack.c.l.b16 %v2279
        %v2319 = vunpack.c.l.b16 %v2280
        %v2320 = vpack.c.b16 %v2305, %v2304
        %v2321 = vpack.c.b16 %v2307, %v2306
        %v2322 = vpack.c.b16 %v2309, %v2308
        %v2323 = vpack.c.b16 %v2311, %v2310
        %v2324 = vpack.c.b16 %v2313, %v2312
        %v2325 = vpack.c.b16 %v2315, %v2314
        %v2326 = vpack.c.b16 %v2317, %v2316
        %v2327 = vpack.c.b16 %v2319, %v2318
        %2336 = vmatprep.subr.bf16.mxu0 0
        %2337 = vmatpush1.bf16.msra.mxu0 %v2327
        %2338 = vmatprep.subr.bf16.mxu0 0
        %2339 = vmatpush1.bf16.msra.mxu0 %v2326
        %2340 = vmatprep.subr.bf16.mxu0 0
        %2341 = vmatpush1.bf16.msra.mxu0 %v2325
        %2342 = vmatprep.subr.bf16.mxu0 0
        %2343 = vmatpush1.bf16.msra.mxu0 %v2324
        %2344 = vmatprep.subr.bf16.mxu0 0
        %2345 = vmatpush1.bf16.msra.mxu0 %v2323
        %2346 = vmatprep.subr.bf16.mxu0 0
        %2347 = vmatpush1.bf16.msra.mxu0 %v2322
        %2348 = vmatprep.subr.bf16.mxu0 0
        %2349 = vmatpush1.bf16.msra.mxu0 %v2321
        %2350 = vmatprep.subr.bf16.mxu0 0
        %2351 = vmatpush1.bf16.msra.mxu0 %v2320
        %2352 = vmatprep.subr.bf16.mxu0 0
        %2353 = vmatpush2.bf16.msra.mxu0 0
        %2354 = vmatprep.subr.bf16.mxu0 0
        %2355 = vmatpush2.bf16.msra.mxu0 0
        %2356 = vmatprep.subr.bf16.mxu0 0
        %2357 = vmatpush2.bf16.msra.mxu0 0
        %2358 = vmatprep.subr.bf16.mxu0 0
        %2359 = vmatpush2.bf16.msra.mxu0 0
        %2360 = vmatprep.subr.bf16.mxu0 0
        %2361 = vmatpush2.bf16.msra.mxu0 0
        %2362 = vmatprep.subr.bf16.mxu0 0
        %2363 = vmatpush2.bf16.msra.mxu0 0
        %2364 = vmatprep.subr.bf16.mxu0 0
        %2365 = vmatpush2.bf16.msra.mxu0 0
        %2366 = vmatprep.subr.bf16.mxu0 0
        %2367 = vmatpush2.bf16.msra.mxu0 0
        %2368 = vmatprep.mubr.bf16.mxu0 0
        %2369 = vmatmul.mubr.bf16.gmra.mxu0 %v2257
        %v2370 = vpop.f32.mrf.mxu0
        %v2371 = vadd.f32 %v2286, %v2370
        %v2372 = vpop.f32.mrf.mxu0
        %v2373 = vpop.f32.mrf.mxu0
        %v2374 = vadd.f32 %v2286, %v2373
        %v2375 = vpop.f32.mrf.mxu0
        %2376 = vmatprep.mubr.bf16.mxu0 0
        %2377 = vmatmul.mubr.bf16.gmra.mxu0 %v2258
        %v2378 = vpop.f32.mrf.mxu0
        %v2379 = vadd.f32 %v2286, %v2378
        %v2380 = vpop.f32.mrf.mxu0
        %v2381 = vpop.f32.mrf.mxu0
        %v2382 = vadd.f32 %v2286, %v2381
        %v2383 = vpop.f32.mrf.mxu0
        %2384 = vmatprep.mubr.bf16.mxu0 0
        %2385 = vmatmul.mubr.bf16.gmra.mxu0 %v2259
        %v2386 = vpop.f32.mrf.mxu0
        %v2387 = vadd.f32 %v2286, %v2386
        %v2388 = vpop.f32.mrf.mxu0
        %v2389 = vpop.f32.mrf.mxu0
        %v2390 = vadd.f32 %v2286, %v2389
        %v2391 = vpop.f32.mrf.mxu0
        %2392 = vmatprep.mubr.bf16.mxu0 0
        %2393 = vmatmul.mubr.bf16.gmra.mxu0 %v2260
        %v2394 = vpop.f32.mrf.mxu0
        %v2395 = vadd.f32 %v2286, %v2394
        %v2396 = vpop.f32.mrf.mxu0
        %v2397 = vpop.f32.mrf.mxu0
        %v2398 = vadd.f32 %v2286, %v2397
        %v2399 = vpop.f32.mrf.mxu0
        %2400 = vmatprep.mubr.bf16.mxu0 0
        %2401 = vmatmul.mubr.bf16.gmra.mxu0 %v2261
        %v2402 = vpop.f32.mrf.mxu0
        %v2403 = vadd.f32 %v2286, %v2402
        %v2404 = vpop.f32.mrf.mxu0
        %v2405 = vpop.f32.mrf.mxu0
        %v2406 = vadd.f32 %v2286, %v2405
        %v2407 = vpop.f32.mrf.mxu0
        %2408 = vmatprep.mubr.bf16.mxu0 0
        %2409 = vmatmul.mubr.bf16.gmra.mxu0 %v2262
        %v2410 = vpop.f32.mrf.mxu0
        %v2411 = vadd.f32 %v2286, %v2410
        %v2412 = vpop.f32.mrf.mxu0
        %v2413 = vpop.f32.mrf.mxu0
        %v2414 = vadd.f32 %v2286, %v2413
        %v2415 = vpop.f32.mrf.mxu0
        %2416 = vmatprep.mubr.bf16.mxu0 0
        %2417 = vmatmul.mubr.bf16.gmra.mxu0 %v2263
        %v2418 = vpop.f32.mrf.mxu0
        %v2419 = vadd.f32 %v2286, %v2418
        %v2420 = vpop.f32.mrf.mxu0
        %v2421 = vpop.f32.mrf.mxu0
        %v2422 = vadd.f32 %v2286, %v2421
        %v2423 = vpop.f32.mrf.mxu0
        %2424 = vmatprep.mubr.bf16.mxu0 0
        %2425 = vmatmul.mubr.bf16.gmra.mxu0 %v2264
        %v2426 = vpop.f32.mrf.mxu0
        %v2427 = vadd.f32 %v2286, %v2426
        %v2428 = vpop.f32.mrf.mxu0
        %v2429 = vpop.f32.mrf.mxu0
        %v2430 = vadd.f32 %v2286, %v2429
        %v2431 = vpop.f32.mrf.mxu0
        %2432 = vdwg.mxu0
        %2433 = vst [vmem:[%s341] sm:$0xff] %v2371
        %2434 = vst [vmem:[%s341 + $0x8] sm:$0xff] %v2374
        %2435 = vst [vmem:[%s341 + $0x10] sm:$0xff] %v2379
        %2436 = vst [vmem:[%s341 + $0x18] sm:$0xff] %v2382
        %2437 = vst [vmem:[%s341 + $0x20] sm:$0xff] %v2387
        %2438 = vst [vmem:[%s341 + $0x28] sm:$0xff] %v2390
        %2439 = vst [vmem:[%s341 + $0x30] sm:$0xff] %v2395
        %2440 = vst [vmem:[%s341 + $0x38] sm:$0xff] %v2398
        %2441 = vst [vmem:[%s341 + $0x40] sm:$0xff] %v2403
        %2442 = vst [vmem:[%s341 + $0x48] sm:$0xff] %v2406
        %2443 = vst [vmem:[%s341 + $0x50] sm:$0xff] %v2411
        %2444 = vst [vmem:[%s341 + $0x58] sm:$0xff] %v2414
        %2445 = vst [vmem:[%s341 + $0x60] sm:$0xff] %v2419
        %2446 = vst [vmem:[%s341 + $0x68] sm:$0xff] %v2422
        %2447 = vst [vmem:[%s341 + $0x70] sm:$0xff] %v2427
        %2448 = vst [vmem:[%s341 + $0x78] sm:$0xff] %v2430
        %s2449 = sand.u32 %s186, 1
        %s2450 = scalar_lea.sflag [#allocation4], %s2449
        %s2451 = sand.u32 %s186, 1
        %s2452 = smul.addr %s2451, 128
        %s2453 = scalar_lea.vmem [#allocation10], %s2452
        // Predicated region
        $region65: #{tpu_custom_call.1} parent=47 // pred_check
          %p2454 = pneg %p196
        $region66: #{tpu_custom_call.1} parent=47 // pred_check_branch
          %2456 = sbr.rel (%p2454) target = $region68
        $region67: #{tpu_custom_call.1} parent=47 // pred_region
          %s2457 = smul.u32 16, %s26
          %s2459 = ssub.s32 2048, 2048
          %2460 = vsyncadd %s2450, %s2459
          %s2461 = smul.addr %s2457, 128
          %s2462 = scalar_lea.hbm %s7, %s2461
          %s2463 = sshll.u32 %s2453, 4
          %s2464 = int_to_ptr.vmem [resolvable:$true] %s2463
          %2469 = dma.vmem_to_hbm [thread:$0]  %s2464, 2048, %s2462, %s2450, 128, 128, 8
        $region68: #{tpu_custom_call.1} parent=47 // pred_fallthru
          _
      $region48: #{tpu_custom_call.1} parent=5 // pred_fallthru
        _
      %p2470 = scmp.le.s32.totalorder 2, %s21
      // Predicated region
      $region69: #{tpu_custom_call.1} parent=5 // pred_check
        %p2471 = pneg %p2470
      $region70: #{tpu_custom_call.1} parent=5 // pred_check_branch
        %2473 = sbr.rel (%p2471) target = $region72
      $region71: #{tpu_custom_call.1} parent=5 // pred_region
        %s2474 = ssub.s32 %s21, 2
        // Predicated region
        $region73: #{tpu_custom_call.1} parent=71 // pred_check
          %p2475 = pneg %p202
        $region74: #{tpu_custom_call.1} parent=71 // pred_check_branch
          %2477 = sbr.rel (%p2475) target = $region76
        $region75: #{tpu_custom_call.1} parent=71 // pred_region
          %s2478 = sand.u32 %s187, 1
          %s2479 = scalar_lea.sflag [#allocation4], %s2478
          %s2480 = sand.u32 %s187, 1
          %s2481 = smul.addr %s2480, 128
          %s2482 = scalar_lea.vmem [#allocation10], %s2481
          %2483 = dma.done %s2479, 2048
        $region76: #{tpu_custom_call.1} parent=71 // pred_fallthru
          _
      $region72: #{tpu_custom_call.1} parent=5 // pred_fallthru
        _
    $region6: #{tpu_custom_call.1} parent=1 // loop_footer
      %s25 = sadd.s32 1, %s21
    $region7: #{tpu_custom_call.1} parent=1 // loop_footer_branch
      %20 = sbr.rel target = $region3
    $region8: #{tpu_custom_call.1} parent=1 // loop_exit
      _
    %2484 = vsyncpa [#allocation3], 1
    %s2485 = scalar_lea.sflag [#allocation3], 1
    %2486 = vsyncpa %s2485, 1
    %2487 = vsyncpa [#allocation6], 1
    %2488 = vsyncpa [#allocation9], 1
    %2489 = vsyncpa [#allocation4], 1
    %s2490 = scalar_lea.sflag [#allocation4], 1
    %2491 = vsyncpa %s2490, 1

</llo_original>
